<compile_context>
chip_gen: v7x
topology: tpu7x:2x2x1
jax: 0.10.0
libtpu: 0.0.40
codegen_flags: <defaults>
</compile_context>

<pallas_src>
import functools

import jax
import jax.numpy as jnp
from jax.experimental import pallas as pl
from jax.experimental.pallas import tpu as pltpu


def _neupix_kernel(x_ref, w1_ref, b1_ref, w2_ref, b2_ref, w3_ref, b3_ref,
                   o_ref, *, encoding_dim):
    L = encoding_dim
    D = x_ref.shape[0]
    x = x_ref[...]                                          # (D, tile_n) f32

    # NeRF positional encoding via double-angle recurrence (2 transcendentals
    # per coordinate, the rest is cheap VPU math in exact f32):
    #   rows [d*2L : d*2L+L]    = sin(2^k * pi * x_d)
    #   rows [d*2L+L : d*2L+2L] = cos(2^k * pi * x_d)
    rows = []
    for d in range(D):                                      # D is tiny & static
        s = jnp.sin(jnp.pi * x[d:d + 1, :])                 # (1, tile_n)
        c = jnp.cos(jnp.pi * x[d:d + 1, :])
        sin_rows, cos_rows = [], []
        for k in range(L):
            sin_rows.append(s)
            cos_rows.append(c)
            if k + 1 < L:
                # theta -> 2*theta:  sin(2t) = 2*s*c,  cos(2t) = 1 - 2*s^2
                s, c = 2.0 * s * c, 1.0 - 2.0 * s * s
        rows += sin_rows + cos_rows
    enc = jnp.concatenate(rows, axis=0).astype(jnp.bfloat16)   # (2LD, tile_n)

    # MLP (feature-major): activations are (features, tile_n); dots are W @ act.
    # bf16 operands, f32 accumulation on the MXU; bias/ReLU epilogue in bf16.
    h1 = jnp.dot(w1_ref[...], enc, preferred_element_type=jnp.float32)
    h1 = jnp.maximum(h1.astype(jnp.bfloat16) + b1_ref[...], 0)
    h2 = jnp.dot(w2_ref[...], h1, preferred_element_type=jnp.float32)
    h2 = jnp.maximum(h2.astype(jnp.bfloat16) + b2_ref[...], 0)
    out = jnp.dot(w3_ref[...], h2, preferred_element_type=jnp.float32) + b3_ref[...]
    o_ref[...] = out.astype(o_ref.dtype)                    # (Dout, tile_n)


def choose_tile_n(N, max_tile=4096):
    """Lane-dense tile (multiple of 128); >=2 grid steps when N allows (v7x)."""
    if N <= 256:
        return 128
    half = (N + 1) // 2
    t = min(max_tile, ((half + 127) // 128) * 128)
    return max(128, t)


@functools.partial(jax.jit, static_argnames=("encoding_dim", "tile_n"))
def neupix_forward(x, w1t, b1, w2t, b2, w3t, b3, *, encoding_dim, tile_n=512):
    """Feature-major NeuPix forward. x: (D, N) f32 -> (Dout, N) f32."""
    D, N = x.shape
    H1, E = w1t.shape
    H2 = w2t.shape[0]
    Dout = w3t.shape[0]
    assert E == D * 2 * encoding_dim
    assert w2t.shape == (H2, H1) and w3t.shape == (Dout, H2)

    # Ragged N: Pallas pads the tail block internally and masks its writeback;
    # no wrapper-side pad/slice (saves a full HBM round-trip of x and out).
    grid = (pl.cdiv(N, tile_n),)

    # bf16 weights/biases for the MXU path (f32 accumulation in-kernel);
    # the final-layer bias stays f32 (added to the f32 accumulator once).
    w1b, w2b, w3b = (w.astype(jnp.bfloat16) for w in (w1t, w2t, w3t))
    b1b, b2b = b1.astype(jnp.bfloat16), b2.astype(jnp.bfloat16)

    def full(shape):
        # whole-array (un-tiled) operand, replicated across the batch grid
        return pl.BlockSpec(shape, lambda i, _s=shape: tuple(0 for _ in _s))

    kernel = functools.partial(_neupix_kernel, encoding_dim=encoding_dim)

    out = pl.pallas_call(
        kernel,
        out_shape=jax.ShapeDtypeStruct((Dout, N), x.dtype),
        grid_spec=pltpu.PrefetchScalarGridSpec(
            num_scalar_prefetch=0,
            grid=grid,
            in_specs=[
                pl.BlockSpec((D, tile_n), lambda i: (0, i)),   # x tile, lane-dense
                full((H1, E)), full((H1, 1)),                  # layer 1
                full((H2, H1)), full((H2, 1)),                 # layer 2
                full((Dout, H2)), full((Dout, 1)),             # layer 3
            ],
            out_specs=pl.BlockSpec((Dout, tile_n), lambda i: (0, i)),
        ),
        compiler_params=pltpu.CompilerParams(
            dimension_semantics=("parallel",)),                # megacore-shardable
    )(x, w1b, b1b, w2b, b2b, w3b, b3)
    return out


def reference_match(x, w1t, b1, w2t, b2, w3t, b3, encoding_dim):
    """Pure-JAX reference mimicking the kernel's precision recipe."""
    D = x.shape[0]
    L = encoding_dim
    rows = []
    for d in range(D):
        s = jnp.sin(jnp.pi * x[d:d + 1, :])
        c = jnp.cos(jnp.pi * x[d:d + 1, :])
        sin_rows, cos_rows = [], []
        for k in range(L):
            sin_rows.append(s)
            cos_rows.append(c)
            if k + 1 < L:
                s, c = 2.0 * s * c, 1.0 - 2.0 * s * s
        rows += sin_rows + cos_rows
    enc = jnp.concatenate(rows, axis=0).astype(jnp.bfloat16)
    w1b, w2b, w3b = (w.astype(jnp.bfloat16) for w in (w1t, w2t, w3t))
    b1b, b2b = b1.astype(jnp.bfloat16), b2.astype(jnp.bfloat16)
    h1 = jnp.dot(w1b, enc, preferred_element_type=jnp.float32)
    h1 = jnp.maximum(h1.astype(jnp.bfloat16) + b1b, 0)
    h2 = jnp.dot(w2b, h1, preferred_element_type=jnp.float32)
    h2 = jnp.maximum(h2.astype(jnp.bfloat16) + b2b, 0)
    return jnp.dot(w3b, h2, preferred_element_type=jnp.float32) + b3


def reference_f32(x, w1t, b1, w2t, b2, w3t, b3, encoding_dim):
    """PyTorch NeuPix semantics in full f32 (NeRF encode -> Linear/ReLU MLP)."""
    D = x.shape[0]
    L = encoding_dim
    freqs = (2.0 ** jnp.arange(L, dtype=jnp.float32))[:, None] * jnp.pi  # (L,1)
    blocks = []
    for d in range(D):
        ang = freqs * x[d:d + 1, :]
        blocks += [jnp.sin(ang), jnp.cos(ang)]
    enc = jnp.concatenate(blocks, axis=0)                                # (2LD, N)
    dot = functools.partial(jnp.dot, precision=jax.lax.Precision.HIGHEST)
    h1 = jnp.maximum(dot(w1t, enc) + b1, 0.0)
    h2 = jnp.maximum(dot(w2t, h1) + b2, 0.0)
    return dot(w3t, h2) + b3


if __name__ == "__main__":
    # NeuPix(layers=[40, 64, 64, 3], encoding_dim=10): 2 input coords,
    # encoded size = 2 * 2 * 10 = 40 = layers[0].
    encoding_dim = 10
    num_coords = 2
    layers = [num_coords * 2 * encoding_dim, 64, 64, 3]
    N = 1000  # deliberately not a tile multiple (exercises the masked tail)

    key = jax.random.PRNGKey(0)
    kx, k1, kb1, k2, kb2, k3, kb3 = jax.random.split(key, 7)

    # Feature-major coordinates in [0, 1)
    x = jax.random.uniform(kx, (num_coords, N), dtype=jnp.float32)

    # Deterministic parameter init; weights stored transposed (out, in)
    def linear_init(kw, kb, fan_in, fan_out):
        bound = fan_in ** -0.5
        wT = jax.random.uniform(kw, (fan_out, fan_in), minval=-bound, maxval=bound,
                                dtype=jnp.float32)
        b = jax.random.uniform(kb, (fan_out, 1), minval=-bound, maxval=bound,
                               dtype=jnp.float32)
        return wT, b

    w1t, b1 = linear_init(k1, kb1, layers[0], layers[1])
    w2t, b2 = linear_init(k2, kb2, layers[1], layers[2])
    w3t, b3 = linear_init(k3, kb3, layers[2], layers[3])

    tile_n = choose_tile_n(N)   # 512 -> grid of 2 (both v7x cores busy)
    out = neupix_forward(x, w1t, b1, w2t, b2, w3t, b3,
                         encoding_dim=encoding_dim, tile_n=tile_n)
    out = jax.block_until_ready(out)
    assert out.shape == (layers[-1], N)

    # 1) Tight check vs. a reference that uses the same precision recipe.
    ref_m = reference_match(x, w1t, b1, w2t, b2, w3t, b3, encoding_dim)
    assert jnp.allclose(out, ref_m, atol=1e-2, rtol=1e-2)

    # 2) Semantic check vs. the full-f32 PyTorch-equivalent forward
    #    (slack accounts for bf16 weight/activation rounding + the
    #    double-angle recurrence, both well below this bound).
    ref32 = reference_f32(x, w1t, b1, w2t, b2, w3t, b3, encoding_dim)
    assert float(jnp.max(jnp.abs(out - ref32))) < 7e-2

    print("KERNEL_OK")
</pallas_src>

<mosaic_0001>
module attributes {stable_mosaic.version = 11 : i64} {
  func.func @_neupix_kernel(%arg0: i32, %arg1: memref<2x512xf32, #tpu.memory_space<vmem>>, %arg2: memref<64x40xbf16, #tpu.memory_space<vmem>>, %arg3: memref<64x1xbf16, #tpu.memory_space<vmem>>, %arg4: memref<64x64xbf16, #tpu.memory_space<vmem>>, %arg5: memref<64x1xbf16, #tpu.memory_space<vmem>>, %arg6: memref<3x64xbf16, #tpu.memory_space<vmem>>, %arg7: memref<3x1xf32, #tpu.memory_space<vmem>>, %arg8: memref<3x512xf32, #tpu.memory_space<vmem>>) attributes {dimension_semantics = [#tpu.dimension_semantics<parallel>], iteration_bounds = array<i64: 2>, scalar_prefetch = 0 : i64, scratch_operands = 0 : i64, tpu.core_type = #tpu.core_type<tc>, window_params = [{transform_indices = @transform_0, window_bounds = array<i64: 2, 512>}, {pipeline_mode = #tpu.pipeline_mode<synchronous>, transform_indices = @transform_1, window_bounds = array<i64: 64, 40>}, {pipeline_mode = #tpu.pipeline_mode<synchronous>, transform_indices = @transform_2, window_bounds = array<i64: 64, 1>}, {pipeline_mode = #tpu.pipeline_mode<synchronous>, transform_indices = @transform_3, window_bounds = array<i64: 64, 64>}, {pipeline_mode = #tpu.pipeline_mode<synchronous>, transform_indices = @transform_4, window_bounds = array<i64: 64, 1>}, {pipeline_mode = #tpu.pipeline_mode<synchronous>, transform_indices = @transform_5, window_bounds = array<i64: 3, 64>}, {pipeline_mode = #tpu.pipeline_mode<synchronous>, transform_indices = @transform_6, window_bounds = array<i64: 3, 1>}, {transform_indices = @transform_7, window_bounds = array<i64: 3, 512>}]} {
    %c0 = arith.constant 0 : index
    %c0_0 = arith.constant 0 : index
    %0 = vector.load %arg1[%c0, %c0_0] : memref<2x512xf32, #tpu.memory_space<vmem>>, vector<2x512xf32>
    %1 = vector.extract_strided_slice %0 {offsets = [0, 0], sizes = [1, 512], strides = [1, 1]} : vector<2x512xf32> to vector<1x512xf32>
    %cst = arith.constant 3.14159274 : f32
    %2 = vector.broadcast %cst : f32 to vector<1x512xf32>
    %3 = arith.mulf %2, %1 : vector<1x512xf32>
    %4 = math.sin %3 : vector<1x512xf32>
    %5 = vector.extract_strided_slice %0 {offsets = [0, 0], sizes = [1, 512], strides = [1, 1]} : vector<2x512xf32> to vector<1x512xf32>
    %cst_1 = arith.constant 3.14159274 : f32
    %6 = vector.broadcast %cst_1 : f32 to vector<1x512xf32>
    %7 = arith.mulf %6, %5 : vector<1x512xf32>
    %8 = math.cos %7 : vector<1x512xf32>
    %cst_2 = arith.constant 2.000000e+00 : f32
    %9 = vector.broadcast %cst_2 : f32 to vector<1x512xf32>
    %10 = arith.mulf %9, %4 : vector<1x512xf32>
    %11 = arith.mulf %10, %8 : vector<1x512xf32>
    %cst_3 = arith.constant 2.000000e+00 : f32
    %12 = vector.broadcast %cst_3 : f32 to vector<1x512xf32>
    %13 = arith.mulf %12, %4 : vector<1x512xf32>
    %14 = arith.mulf %13, %4 : vector<1x512xf32>
    %cst_4 = arith.constant 1.000000e+00 : f32
    %15 = vector.broadcast %cst_4 : f32 to vector<1x512xf32>
    %16 = arith.subf %15, %14 : vector<1x512xf32>
    %cst_5 = arith.constant 2.000000e+00 : f32
    %17 = vector.broadcast %cst_5 : f32 to vector<1x512xf32>
    %18 = arith.mulf %17, %11 : vector<1x512xf32>
    %19 = arith.mulf %18, %16 : vector<1x512xf32>
    %cst_6 = arith.constant 2.000000e+00 : f32
    %20 = vector.broadcast %cst_6 : f32 to vector<1x512xf32>
    %21 = arith.mulf %20, %11 : vector<1x512xf32>
    %22 = arith.mulf %21, %11 : vector<1x512xf32>
    %cst_7 = arith.constant 1.000000e+00 : f32
    %23 = vector.broadcast %cst_7 : f32 to vector<1x512xf32>
    %24 = arith.subf %23, %22 : vector<1x512xf32>
    %cst_8 = arith.constant 2.000000e+00 : f32
    %25 = vector.broadcast %cst_8 : f32 to vector<1x512xf32>
    %26 = arith.mulf %25, %19 : vector<1x512xf32>
    %27 = arith.mulf %26, %24 : vector<1x512xf32>
    %cst_9 = arith.constant 2.000000e+00 : f32
    %28 = vector.broadcast %cst_9 : f32 to vector<1x512xf32>
    %29 = arith.mulf %28, %19 : vector<1x512xf32>
    %30 = arith.mulf %29, %19 : vector<1x512xf32>
    %cst_10 = arith.constant 1.000000e+00 : f32
    %31 = vector.broadcast %cst_10 : f32 to vector<1x512xf32>
    %32 = arith.subf %31, %30 : vector<1x512xf32>
    %cst_11 = arith.constant 2.000000e+00 : f32
    %33 = vector.broadcast %cst_11 : f32 to vector<1x512xf32>
    %34 = arith.mulf %33, %27 : vector<1x512xf32>
    %35 = arith.mulf %34, %32 : vector<1x512xf32>
    %cst_12 = arith.constant 2.000000e+00 : f32
    %36 = vector.broadcast %cst_12 : f32 to vector<1x512xf32>
    %37 = arith.mulf %36, %27 : vector<1x512xf32>
    %38 = arith.mulf %37, %27 : vector<1x512xf32>
    %cst_13 = arith.constant 1.000000e+00 : f32
    %39 = vector.broadcast %cst_13 : f32 to vector<1x512xf32>
    %40 = arith.subf %39, %38 : vector<1x512xf32>
    %cst_14 = arith.constant 2.000000e+00 : f32
    %41 = vector.broadcast %cst_14 : f32 to vector<1x512xf32>
    %42 = arith.mulf %41, %35 : vector<1x512xf32>
    %43 = arith.mulf %42, %40 : vector<1x512xf32>
    %cst_15 = arith.constant 2.000000e+00 : f32
    %44 = vector.broadcast %cst_15 : f32 to vector<1x512xf32>
    %45 = arith.mulf %44, %35 : vector<1x512xf32>
    %46 = arith.mulf %45, %35 : vector<1x512xf32>
    %cst_16 = arith.constant 1.000000e+00 : f32
    %47 = vector.broadcast %cst_16 : f32 to vector<1x512xf32>
    %48 = arith.subf %47, %46 : vector<1x512xf32>
    %cst_17 = arith.constant 2.000000e+00 : f32
    %49 = vector.broadcast %cst_17 : f32 to vector<1x512xf32>
    %50 = arith.mulf %49, %43 : vector<1x512xf32>
    %51 = arith.mulf %50, %48 : vector<1x512xf32>
    %cst_18 = arith.constant 2.000000e+00 : f32
    %52 = vector.broadcast %cst_18 : f32 to vector<1x512xf32>
    %53 = arith.mulf %52, %43 : vector<1x512xf32>
    %54 = arith.mulf %53, %43 : vector<1x512xf32>
    %cst_19 = arith.constant 1.000000e+00 : f32
    %55 = vector.broadcast %cst_19 : f32 to vector<1x512xf32>
    %56 = arith.subf %55, %54 : vector<1x512xf32>
    %cst_20 = arith.constant 2.000000e+00 : f32
    %57 = vector.broadcast %cst_20 : f32 to vector<1x512xf32>
    %58 = arith.mulf %57, %51 : vector<1x512xf32>
    %59 = arith.mulf %58, %56 : vector<1x512xf32>
    %cst_21 = arith.constant 2.000000e+00 : f32
    %60 = vector.broadcast %cst_21 : f32 to vector<1x512xf32>
    %61 = arith.mulf %60, %51 : vector<1x512xf32>
    %62 = arith.mulf %61, %51 : vector<1x512xf32>
    %cst_22 = arith.constant 1.000000e+00 : f32
    %63 = vector.broadcast %cst_22 : f32 to vector<1x512xf32>
    %64 = arith.subf %63, %62 : vector<1x512xf32>
    %cst_23 = arith.constant 2.000000e+00 : f32
    %65 = vector.broadcast %cst_23 : f32 to vector<1x512xf32>
    %66 = arith.mulf %65, %59 : vector<1x512xf32>
    %67 = arith.mulf %66, %64 : vector<1x512xf32>
    %cst_24 = arith.constant 2.000000e+00 : f32
    %68 = vector.broadcast %cst_24 : f32 to vector<1x512xf32>
    %69 = arith.mulf %68, %59 : vector<1x512xf32>
    %70 = arith.mulf %69, %59 : vector<1x512xf32>
    %cst_25 = arith.constant 1.000000e+00 : f32
    %71 = vector.broadcast %cst_25 : f32 to vector<1x512xf32>
    %72 = arith.subf %71, %70 : vector<1x512xf32>
    %cst_26 = arith.constant 2.000000e+00 : f32
    %73 = vector.broadcast %cst_26 : f32 to vector<1x512xf32>
    %74 = arith.mulf %73, %67 : vector<1x512xf32>
    %75 = arith.mulf %74, %72 : vector<1x512xf32>
    %cst_27 = arith.constant 2.000000e+00 : f32
    %76 = vector.broadcast %cst_27 : f32 to vector<1x512xf32>
    %77 = arith.mulf %76, %67 : vector<1x512xf32>
    %78 = arith.mulf %77, %67 : vector<1x512xf32>
    %cst_28 = arith.constant 1.000000e+00 : f32
    %79 = vector.broadcast %cst_28 : f32 to vector<1x512xf32>
    %80 = arith.subf %79, %78 : vector<1x512xf32>
    %81 = vector.extract_strided_slice %0 {offsets = [1, 0], sizes = [1, 512], strides = [1, 1]} : vector<2x512xf32> to vector<1x512xf32>
    %cst_29 = arith.constant 3.14159274 : f32
    %82 = vector.broadcast %cst_29 : f32 to vector<1x512xf32>
    %83 = arith.mulf %82, %81 : vector<1x512xf32>
    %84 = math.sin %83 : vector<1x512xf32>
    %85 = vector.extract_strided_slice %0 {offsets = [1, 0], sizes = [1, 512], strides = [1, 1]} : vector<2x512xf32> to vector<1x512xf32>
    %cst_30 = arith.constant 3.14159274 : f32
    %86 = vector.broadcast %cst_30 : f32 to vector<1x512xf32>
    %87 = arith.mulf %86, %85 : vector<1x512xf32>
    %88 = math.cos %87 : vector<1x512xf32>
    %cst_31 = arith.constant 2.000000e+00 : f32
    %89 = vector.broadcast %cst_31 : f32 to vector<1x512xf32>
    %90 = arith.mulf %89, %84 : vector<1x512xf32>
    %91 = arith.mulf %90, %88 : vector<1x512xf32>
    %cst_32 = arith.constant 2.000000e+00 : f32
    %92 = vector.broadcast %cst_32 : f32 to vector<1x512xf32>
    %93 = arith.mulf %92, %84 : vector<1x512xf32>
    %94 = arith.mulf %93, %84 : vector<1x512xf32>
    %cst_33 = arith.constant 1.000000e+00 : f32
    %95 = vector.broadcast %cst_33 : f32 to vector<1x512xf32>
    %96 = arith.subf %95, %94 : vector<1x512xf32>
    %cst_34 = arith.constant 2.000000e+00 : f32
    %97 = vector.broadcast %cst_34 : f32 to vector<1x512xf32>
    %98 = arith.mulf %97, %91 : vector<1x512xf32>
    %99 = arith.mulf %98, %96 : vector<1x512xf32>
    %cst_35 = arith.constant 2.000000e+00 : f32
    %100 = vector.broadcast %cst_35 : f32 to vector<1x512xf32>
    %101 = arith.mulf %100, %91 : vector<1x512xf32>
    %102 = arith.mulf %101, %91 : vector<1x512xf32>
    %cst_36 = arith.constant 1.000000e+00 : f32
    %103 = vector.broadcast %cst_36 : f32 to vector<1x512xf32>
    %104 = arith.subf %103, %102 : vector<1x512xf32>
    %cst_37 = arith.constant 2.000000e+00 : f32
    %105 = vector.broadcast %cst_37 : f32 to vector<1x512xf32>
    %106 = arith.mulf %105, %99 : vector<1x512xf32>
    %107 = arith.mulf %106, %104 : vector<1x512xf32>
    %cst_38 = arith.constant 2.000000e+00 : f32
    %108 = vector.broadcast %cst_38 : f32 to vector<1x512xf32>
    %109 = arith.mulf %108, %99 : vector<1x512xf32>
    %110 = arith.mulf %109, %99 : vector<1x512xf32>
    %cst_39 = arith.constant 1.000000e+00 : f32
    %111 = vector.broadcast %cst_39 : f32 to vector<1x512xf32>
    %112 = arith.subf %111, %110 : vector<1x512xf32>
    %cst_40 = arith.constant 2.000000e+00 : f32
    %113 = vector.broadcast %cst_40 : f32 to vector<1x512xf32>
    %114 = arith.mulf %113, %107 : vector<1x512xf32>
    %115 = arith.mulf %114, %112 : vector<1x512xf32>
    %cst_41 = arith.constant 2.000000e+00 : f32
    %116 = vector.broadcast %cst_41 : f32 to vector<1x512xf32>
    %117 = arith.mulf %116, %107 : vector<1x512xf32>
    %118 = arith.mulf %117, %107 : vector<1x512xf32>
    %cst_42 = arith.constant 1.000000e+00 : f32
    %119 = vector.broadcast %cst_42 : f32 to vector<1x512xf32>
    %120 = arith.subf %119, %118 : vector<1x512xf32>
    %cst_43 = arith.constant 2.000000e+00 : f32
    %121 = vector.broadcast %cst_43 : f32 to vector<1x512xf32>
    %122 = arith.mulf %121, %115 : vector<1x512xf32>
    %123 = arith.mulf %122, %120 : vector<1x512xf32>
    %cst_44 = arith.constant 2.000000e+00 : f32
    %124 = vector.broadcast %cst_44 : f32 to vector<1x512xf32>
    %125 = arith.mulf %124, %115 : vector<1x512xf32>
    %126 = arith.mulf %125, %115 : vector<1x512xf32>
    %cst_45 = arith.constant 1.000000e+00 : f32
    %127 = vector.broadcast %cst_45 : f32 to vector<1x512xf32>
    %128 = arith.subf %127, %126 : vector<1x512xf32>
    %cst_46 = arith.constant 2.000000e+00 : f32
    %129 = vector.broadcast %cst_46 : f32 to vector<1x512xf32>
    %130 = arith.mulf %129, %123 : vector<1x512xf32>
    %131 = arith.mulf %130, %128 : vector<1x512xf32>
    %cst_47 = arith.constant 2.000000e+00 : f32
    %132 = vector.broadcast %cst_47 : f32 to vector<1x512xf32>
    %133 = arith.mulf %132, %123 : vector<1x512xf32>
    %134 = arith.mulf %133, %123 : vector<1x512xf32>
    %cst_48 = arith.constant 1.000000e+00 : f32
    %135 = vector.broadcast %cst_48 : f32 to vector<1x512xf32>
    %136 = arith.subf %135, %134 : vector<1x512xf32>
    %cst_49 = arith.constant 2.000000e+00 : f32
    %137 = vector.broadcast %cst_49 : f32 to vector<1x512xf32>
    %138 = arith.mulf %137, %131 : vector<1x512xf32>
    %139 = arith.mulf %138, %136 : vector<1x512xf32>
    %cst_50 = arith.constant 2.000000e+00 : f32
    %140 = vector.broadcast %cst_50 : f32 to vector<1x512xf32>
    %141 = arith.mulf %140, %131 : vector<1x512xf32>
    %142 = arith.mulf %141, %131 : vector<1x512xf32>
    %cst_51 = arith.constant 1.000000e+00 : f32
    %143 = vector.broadcast %cst_51 : f32 to vector<1x512xf32>
    %144 = arith.subf %143, %142 : vector<1x512xf32>
    %cst_52 = arith.constant 2.000000e+00 : f32
    %145 = vector.broadcast %cst_52 : f32 to vector<1x512xf32>
    %146 = arith.mulf %145, %139 : vector<1x512xf32>
    %147 = arith.mulf %146, %144 : vector<1x512xf32>
    %cst_53 = arith.constant 2.000000e+00 : f32
    %148 = vector.broadcast %cst_53 : f32 to vector<1x512xf32>
    %149 = arith.mulf %148, %139 : vector<1x512xf32>
    %150 = arith.mulf %149, %139 : vector<1x512xf32>
    %cst_54 = arith.constant 1.000000e+00 : f32
    %151 = vector.broadcast %cst_54 : f32 to vector<1x512xf32>
    %152 = arith.subf %151, %150 : vector<1x512xf32>
    %cst_55 = arith.constant 2.000000e+00 : f32
    %153 = vector.broadcast %cst_55 : f32 to vector<1x512xf32>
    %154 = arith.mulf %153, %147 : vector<1x512xf32>
    %155 = arith.mulf %154, %152 : vector<1x512xf32>
    %cst_56 = arith.constant 2.000000e+00 : f32
    %156 = vector.broadcast %cst_56 : f32 to vector<1x512xf32>
    %157 = arith.mulf %156, %147 : vector<1x512xf32>
    %158 = arith.mulf %157, %147 : vector<1x512xf32>
    %cst_57 = arith.constant 1.000000e+00 : f32
    %159 = vector.broadcast %cst_57 : f32 to vector<1x512xf32>
    %160 = arith.subf %159, %158 : vector<1x512xf32>
    %161 = tpu.concatenate %4, %11, %19, %27, %35, %43, %51, %59, %67, %75, %8, %16, %24, %32, %40, %48 in 0 : vector<1x512xf32>, vector<1x512xf32>, vector<1x512xf32>, vector<1x512xf32>, vector<1x512xf32>, vector<1x512xf32>, vector<1x512xf32>, vector<1x512xf32>, vector<1x512xf32>, vector<1x512xf32>, vector<1x512xf32>, vector<1x512xf32>, vector<1x512xf32>, vector<1x512xf32>, vector<1x512xf32>, vector<1x512xf32> -> vector<16x512xf32>
    %162 = tpu.concatenate %56, %64, %72, %80, %84, %91, %99, %107, %115, %123, %131, %139, %147, %155, %88, %96 in 0 : vector<1x512xf32>, vector<1x512xf32>, vector<1x512xf32>, vector<1x512xf32>, vector<1x512xf32>, vector<1x512xf32>, vector<1x512xf32>, vector<1x512xf32>, vector<1x512xf32>, vector<1x512xf32>, vector<1x512xf32>, vector<1x512xf32>, vector<1x512xf32>, vector<1x512xf32>, vector<1x512xf32>, vector<1x512xf32> -> vector<16x512xf32>
    %163 = tpu.concatenate %104, %112, %120, %128, %136, %144, %152, %160 in 0 : vector<1x512xf32>, vector<1x512xf32>, vector<1x512xf32>, vector<1x512xf32>, vector<1x512xf32>, vector<1x512xf32>, vector<1x512xf32>, vector<1x512xf32> -> vector<8x512xf32>
    %164 = tpu.concatenate %161, %162, %163 in 0 : vector<16x512xf32>, vector<16x512xf32>, vector<8x512xf32> -> vector<40x512xf32>
    %165 = arith.truncf %164 : vector<40x512xf32> to vector<40x512xbf16>
    %c0_58 = arith.constant 0 : index
    %c0_59 = arith.constant 0 : index
    %166 = vector.load %arg2[%c0_58, %c0_59] : memref<64x40xbf16, #tpu.memory_space<vmem>>, vector<64x40xbf16>
    %cst_60 = arith.constant dense<0.000000e+00> : vector<64x512xf32>
    %167 = tpu.matmul %166, %165, %cst_60 {dimension_numbers = #tpu.dot_dimension_numbers<[1], [0], [0], [1], [0, 0, 1, 1], [], []>} : vector<64x40xbf16>, vector<40x512xbf16>, vector<64x512xf32> -> vector<64x512xf32>
    %168 = arith.truncf %167 : vector<64x512xf32> to vector<64x512xbf16>
    %c0_61 = arith.constant 0 : index
    %c0_62 = arith.constant 0 : index
    %169 = vector.load %arg3[%c0_61, %c0_62] : memref<64x1xbf16, #tpu.memory_space<vmem>>, vector<64x1xbf16>
    %170 = vector.broadcast %169 : vector<64x1xbf16> to vector<64x512xbf16>
    %171 = arith.addf %168, %170 : vector<64x512xbf16>
    %cst_63 = arith.constant 0.000000e+00 : bf16
    %172 = vector.broadcast %cst_63 : bf16 to vector<64x512xbf16>
    %173 = arith.maximumf %171, %172 : vector<64x512xbf16>
    %c0_64 = arith.constant 0 : index
    %c0_65 = arith.constant 0 : index
    %174 = vector.load %arg4[%c0_64, %c0_65] : memref<64x64xbf16, #tpu.memory_space<vmem>>, vector<64x64xbf16>
    %cst_66 = arith.constant dense<0.000000e+00> : vector<64x512xf32>
    %175 = tpu.matmul %174, %173, %cst_66 {dimension_numbers = #tpu.dot_dimension_numbers<[1], [0], [0], [1], [0, 0, 1, 1], [], []>} : vector<64x64xbf16>, vector<64x512xbf16>, vector<64x512xf32> -> vector<64x512xf32>
    %176 = arith.truncf %175 : vector<64x512xf32> to vector<64x512xbf16>
    %c0_67 = arith.constant 0 : index
    %c0_68 = arith.constant 0 : index
    %177 = vector.load %arg5[%c0_67, %c0_68] : memref<64x1xbf16, #tpu.memory_space<vmem>>, vector<64x1xbf16>
    %178 = vector.broadcast %177 : vector<64x1xbf16> to vector<64x512xbf16>
    %179 = arith.addf %176, %178 : vector<64x512xbf16>
    %cst_69 = arith.constant 0.000000e+00 : bf16
    %180 = vector.broadcast %cst_69 : bf16 to vector<64x512xbf16>
    %181 = arith.maximumf %179, %180 : vector<64x512xbf16>
    %c0_70 = arith.constant 0 : index
    %c0_71 = arith.constant 0 : index
    %182 = vector.load %arg6[%c0_70, %c0_71] : memref<3x64xbf16, #tpu.memory_space<vmem>>, vector<3x64xbf16>
    %cst_72 = arith.constant dense<0.000000e+00> : vector<3x512xf32>
    %183 = tpu.matmul %182, %181, %cst_72 {dimension_numbers = #tpu.dot_dimension_numbers<[1], [0], [0], [1], [0, 0, 1, 1], [], []>} : vector<3x64xbf16>, vector<64x512xbf16>, vector<3x512xf32> -> vector<3x512xf32>
    %c0_73 = arith.constant 0 : index
    %c0_74 = arith.constant 0 : index
    %184 = vector.load %arg7[%c0_73, %c0_74] : memref<3x1xf32, #tpu.memory_space<vmem>>, vector<3x1xf32>
    %185 = vector.broadcast %184 : vector<3x1xf32> to vector<3x512xf32>
    %186 = arith.addf %183, %185 : vector<3x512xf32>
    %c0_75 = arith.constant 0 : index
    %c0_76 = arith.constant 0 : index
    %187 = vector.load %arg8[%c0_75, %c0_76] : memref<3x512xf32, #tpu.memory_space<vmem>>, vector<3x512xf32>
    tpu.vector_store %arg8[%c0_75, %c0_76], %186 {strides = array<i32>} : memref<3x512xf32, #tpu.memory_space<vmem>>, vector<3x512xf32>,
    return
  }
  func.func @transform_0(%arg0: i32) -> (i32, i32) {
    %c0_i32 = arith.constant 0 : i32
    %c0_i32_0 = arith.constant 0 : i32
    return %c0_i32, %arg0 : i32, i32
  }
  func.func @transform_1(%arg0: i32) -> (i32, i32) {
    %c0_i32 = arith.constant 0 : i32
    %c0_i32_0 = arith.constant 0 : i32
    %c0_i32_1 = arith.constant 0 : i32
    return %c0_i32, %c0_i32_0 : i32, i32
  }
  func.func @transform_2(%arg0: i32) -> (i32, i32) {
    %c0_i32 = arith.constant 0 : i32
    %c0_i32_0 = arith.constant 0 : i32
    %c0_i32_1 = arith.constant 0 : i32
    return %c0_i32, %c0_i32_0 : i32, i32
  }
  func.func @transform_3(%arg0: i32) -> (i32, i32) {
    %c0_i32 = arith.constant 0 : i32
    %c0_i32_0 = arith.constant 0 : i32
    %c0_i32_1 = arith.constant 0 : i32
    return %c0_i32, %c0_i32_0 : i32, i32
  }
  func.func @transform_4(%arg0: i32) -> (i32, i32) {
    %c0_i32 = arith.constant 0 : i32
    %c0_i32_0 = arith.constant 0 : i32
    %c0_i32_1 = arith.constant 0 : i32
    return %c0_i32, %c0_i32_0 : i32, i32
  }
  func.func @transform_5(%arg0: i32) -> (i32, i32) {
    %c0_i32 = arith.constant 0 : i32
    %c0_i32_0 = arith.constant 0 : i32
    %c0_i32_1 = arith.constant 0 : i32
    return %c0_i32, %c0_i32_0 : i32, i32
  }
  func.func @transform_6(%arg0: i32) -> (i32, i32) {
    %c0_i32 = arith.constant 0 : i32
    %c0_i32_0 = arith.constant 0 : i32
    %c0_i32_1 = arith.constant 0 : i32
    return %c0_i32, %c0_i32_0 : i32, i32
  }
  func.func @transform_7(%arg0: i32) -> (i32, i32) {
    %c0_i32 = arith.constant 0 : i32
    %c0_i32_0 = arith.constant 0 : i32
    return %c0_i32, %arg0 : i32, i32
  }
}

</mosaic_0001>

<llo_original>
// kernel: neupix_forward.1
$region0: #{neupix_forward.1}
  #allocation0 [shape = 'u32[]', space=smem, size = 0x4, offset = 0x4, fixed_abs, tag = 'smem constant byte address 0x4 - core index']
  #allocation1 [shape = 'u32[144,128]{1,0:T(1,128)}', space=vmem, size = 0x12000, scoped, tag = 'internal scratch']
  %s0 = inlined_call_operand.vmem [shape: f32[2,1000], index: 0, kind: input, shape index: {}]
  %s1 = inlined_call_operand.vmem [shape: bf16[64,40], index: 1, kind: input, shape index: {}]
  %s2 = inlined_call_operand.vmem [shape: bf16[64,1], index: 2, kind: input, shape index: {}]
  %s3 = inlined_call_operand.vmem [shape: bf16[64,64], index: 3, kind: input, shape index: {}]
  %s4 = inlined_call_operand.vmem [shape: bf16[64,1], index: 4, kind: input, shape index: {}]
  %s5 = inlined_call_operand.vmem [shape: bf16[3,64], index: 5, kind: input, shape index: {}]
  %s6 = inlined_call_operand.vmem [shape: f32[3,1], index: 6, kind: input, shape index: {}]
  %s7 = inlined_call_operand.hbm [shape: f32[3,1000], index: 7, kind: output, shape index: {}]
  %s8 = sld [smem:[#allocation0]]
  $region61: #{neupix_forward.1} parent=0
    _
  %s10 = ssub.s32 1, %s8
  %s11 = scalar_select 0, %s10, %s8
  $region1: #{neupix_forward.1} parent=0
    #allocation2 [shape = 'u8[16384]{0}', space=vmem, size = 0x4000, scoped, tag = 'output window, operand 0']
    #allocation3 [shape = 's32[2]{0}', space=sflag, size = 0x8, scoped, tag = 'scoped memory for neupix_forward.1']
    %12 = vsyncpa [#allocation3], 0
    %s13 = scalar_lea.sflag [#allocation3], 1
    %14 = vsyncpa %s13, 0
    loop: start=0, step=1, limit=4
    $region2: #{neupix_forward.1} parent=1 // loop_pre_header
      _
    $region3: #{neupix_forward.1} parent=1 // loop_header
      %s16 = sphi 0, %s20
      %p17 = scmp.ge.s32.totalorder %s16, 4
      %s26 = sphi 0, %s28
      %s29 = sphi 0, %s26
      %s30 = sphi 0, %s29
      %s46 = sphi 0, %s30
      %s50 = sphi 0, %s50
      %s52 = sphi 0, %s50
      %s53 = sphi 0, %s52
      %s67 = sphi 0, %s53
      %s71 = sphi 0, %s71
      %s73 = sphi 0, %s71
      %s74 = sphi 0, %s73
      %s88 = sphi 0, %s74
      %s92 = sphi 0, %s92
      %s94 = sphi 0, %s92
      %s95 = sphi 0, %s94
      %s109 = sphi 0, %s95
      %s113 = sphi 0, %s113
      %s115 = sphi 0, %s113
      %s116 = sphi 0, %s115
      %s130 = sphi 0, %s116
      %s134 = sphi 0, %s134
      %s136 = sphi 0, %s134
      %s137 = sphi 0, %s136
      %s151 = sphi 0, %s137
      %s155 = sphi 0, %s155
      %s157 = sphi 0, %s155
      %s158 = sphi 0, %s157
      %s172 = sphi 0, %s158
      %s178 = sphi 0, %s180
      %s181 = sphi 0, %s178
      %s182 = sphi 0, %s181
      %s198 = sphi 0, %s182
    $region4: #{neupix_forward.1} parent=1 // loop_header_branch
      %19 = sbr.rel (%p17) target = $region8
    $region5: #{neupix_forward.1} parent=1 // loop_body
      %s21 = ssub.s32 %s16, 1
      %s22 = ssub.s32 %s16, 2
      %s23 = sadd.s32 %s16, 1
      %s24 = ssub.s32 %s16, %s23
      %p25 = scmp.eq.s32.totalorder %s24, 0
      %s27 = sadd.s32 %s26, 1
      %s28 = scalar_select %p25, %s26, %s27
      %p31 = pneg %p25
      %p32 = scmp.eq.s32.totalorder %s16, 1
      %p33 = por %p31, %p32
      %p34 = scmp.ne.s32.totalorder %s26, %s29
      %p35 = scmp.eq.s32.totalorder %s16, 0
      %p36 = por %p34, %p35
      %p37 = scmp.ne.s32.totalorder %s26, %s29
      %p38 = scmp.eq.s32.totalorder %s21, 1
      %p39 = por %p37, %p38
      %p40 = scmp.ne.s32.totalorder %s29, %s30
      %p41 = scmp.eq.s32.totalorder %s21, 0
      %p42 = por %p40, %p41
      %p43 = scmp.ne.s32.totalorder %s29, %s30
      %p44 = scmp.eq.s32.totalorder %s22, 1
      %p45 = por %p43, %p44
      %p47 = scmp.ne.s32.totalorder %s30, %s46
      %p48 = scmp.eq.s32.totalorder %s22, 0
      %p49 = por %p47, %p48
      %s51 = sadd.s32 %s50, 1
      %p54 = scmp.eq.s32.totalorder %s16, 1
      %p55 = scmp.ne.s32.totalorder %s50, %s52
      %p56 = scmp.eq.s32.totalorder %s16, 0
      %p57 = por %p55, %p56
      %p58 = scmp.ne.s32.totalorder %s50, %s52
      %p59 = scmp.eq.s32.totalorder %s21, 1
      %p60 = por %p58, %p59
      %p61 = scmp.ne.s32.totalorder %s52, %s53
      %p62 = scmp.eq.s32.totalorder %s21, 0
      %p63 = por %p61, %p62
      %p64 = scmp.ne.s32.totalorder %s52, %s53
      %p65 = scmp.eq.s32.totalorder %s22, 1
      %p66 = por %p64, %p65
      %p68 = scmp.ne.s32.totalorder %s53, %s67
      %p69 = scmp.eq.s32.totalorder %s22, 0
      %p70 = por %p68, %p69
      %s72 = sadd.s32 %s71, 1
      %p75 = scmp.eq.s32.totalorder %s16, 1
      %p76 = scmp.ne.s32.totalorder %s71, %s73
      %p77 = scmp.eq.s32.totalorder %s16, 0
      %p78 = por %p76, %p77
      %p79 = scmp.ne.s32.totalorder %s71, %s73
      %p80 = scmp.eq.s32.totalorder %s21, 1
      %p81 = por %p79, %p80
      %p82 = scmp.ne.s32.totalorder %s73, %s74
      %p83 = scmp.eq.s32.totalorder %s21, 0
      %p84 = por %p82, %p83
      %p85 = scmp.ne.s32.totalorder %s73, %s74
      %p86 = scmp.eq.s32.totalorder %s22, 1
      %p87 = por %p85, %p86
      %p89 = scmp.ne.s32.totalorder %s74, %s88
      %p90 = scmp.eq.s32.totalorder %s22, 0
      %p91 = por %p89, %p90
      %s93 = sadd.s32 %s92, 1
      %p96 = scmp.eq.s32.totalorder %s16, 1
      %p97 = scmp.ne.s32.totalorder %s92, %s94
      %p98 = scmp.eq.s32.totalorder %s16, 0
      %p99 = por %p97, %p98
      %p100 = scmp.ne.s32.totalorder %s92, %s94
      %p101 = scmp.eq.s32.totalorder %s21, 1
      %p102 = por %p100, %p101
      %p103 = scmp.ne.s32.totalorder %s94, %s95
      %p104 = scmp.eq.s32.totalorder %s21, 0
      %p105 = por %p103, %p104
      %p106 = scmp.ne.s32.totalorder %s94, %s95
      %p107 = scmp.eq.s32.totalorder %s22, 1
      %p108 = por %p106, %p107
      %p110 = scmp.ne.s32.totalorder %s95, %s109
      %p111 = scmp.eq.s32.totalorder %s22, 0
      %p112 = por %p110, %p111
      %s114 = sadd.s32 %s113, 1
      %p117 = scmp.eq.s32.totalorder %s16, 1
      %p118 = scmp.ne.s32.totalorder %s113, %s115
      %p119 = scmp.eq.s32.totalorder %s16, 0
      %p120 = por %p118, %p119
      %p121 = scmp.ne.s32.totalorder %s113, %s115
      %p122 = scmp.eq.s32.totalorder %s21, 1
      %p123 = por %p121, %p122
      %p124 = scmp.ne.s32.totalorder %s115, %s116
      %p125 = scmp.eq.s32.totalorder %s21, 0
      %p126 = por %p124, %p125
      %p127 = scmp.ne.s32.totalorder %s115, %s116
      %p128 = scmp.eq.s32.totalorder %s22, 1
      %p129 = por %p127, %p128
      %p131 = scmp.ne.s32.totalorder %s116, %s130
      %p132 = scmp.eq.s32.totalorder %s22, 0
      %p133 = por %p131, %p132
      %s135 = sadd.s32 %s134, 1
      %p138 = scmp.eq.s32.totalorder %s16, 1
      %p139 = scmp.ne.s32.totalorder %s134, %s136
      %p140 = scmp.eq.s32.totalorder %s16, 0
      %p141 = por %p139, %p140
      %p142 = scmp.ne.s32.totalorder %s134, %s136
      %p143 = scmp.eq.s32.totalorder %s21, 1
      %p144 = por %p142, %p143
      %p145 = scmp.ne.s32.totalorder %s136, %s137
      %p146 = scmp.eq.s32.totalorder %s21, 0
      %p147 = por %p145, %p146
      %p148 = scmp.ne.s32.totalorder %s136, %s137
      %p149 = scmp.eq.s32.totalorder %s22, 1
      %p150 = por %p148, %p149
      %p152 = scmp.ne.s32.totalorder %s137, %s151
      %p153 = scmp.eq.s32.totalorder %s22, 0
      %p154 = por %p152, %p153
      %s156 = sadd.s32 %s155, 1
      %p159 = scmp.eq.s32.totalorder %s16, 1
      %p160 = scmp.ne.s32.totalorder %s155, %s157
      %p161 = scmp.eq.s32.totalorder %s16, 0
      %p162 = por %p160, %p161
      %p163 = scmp.ne.s32.totalorder %s155, %s157
      %p164 = scmp.eq.s32.totalorder %s21, 1
      %p165 = por %p163, %p164
      %p166 = scmp.ne.s32.totalorder %s157, %s158
      %p167 = scmp.eq.s32.totalorder %s21, 0
      %p168 = por %p166, %p167
      %p169 = scmp.ne.s32.totalorder %s157, %s158
      %p170 = scmp.eq.s32.totalorder %s22, 1
      %p171 = por %p169, %p170
      %p173 = scmp.ne.s32.totalorder %s158, %s172
      %p174 = scmp.eq.s32.totalorder %s22, 0
      %p175 = por %p173, %p174
      %s176 = ssub.s32 %s16, %s23
      %p177 = scmp.eq.s32.totalorder %s176, 0
      %s179 = sadd.s32 %s178, 1
      %s180 = scalar_select %p177, %s178, %s179
      %p183 = pneg %p177
      %p184 = scmp.eq.s32.totalorder %s16, 1
      %p185 = por %p183, %p184
      %p186 = scmp.ne.s32.totalorder %s178, %s181
      %p187 = scmp.eq.s32.totalorder %s16, 0
      %p188 = por %p186, %p187
      %p189 = scmp.ne.s32.totalorder %s178, %s181
      %p190 = scmp.eq.s32.totalorder %s21, 1
      %p191 = por %p189, %p190
      %p192 = scmp.ne.s32.totalorder %s181, %s182
      %p193 = scmp.eq.s32.totalorder %s21, 0
      %p194 = por %p192, %p193
      %p195 = scmp.ne.s32.totalorder %s181, %s182
      %p196 = scmp.eq.s32.totalorder %s22, 1
      %p197 = por %p195, %p196
      %p199 = scmp.ne.s32.totalorder %s182, %s198
      %p200 = scmp.eq.s32.totalorder %s22, 0
      %p201 = por %p199, %p200
      %p202 = scmp.le.s32.totalorder 1, %s16
      %p203 = scmp.lt.s32.totalorder %s16, 3
      %p204 = pnand %p202, %p203
      %p205 = pneg %p204
      // Predicated region
      $region9: #{neupix_forward.1} parent=5 // pred_check
        _
      $region10: #{neupix_forward.1} parent=5 // pred_check_branch
        %207 = sbr.rel (%p204) target = $region12
      $region11: #{neupix_forward.1} parent=5 // pred_region
        %s208 = ssub.s32 %s16, 1
        // Predicated region
        $region13: #{neupix_forward.1} parent=11 // pred_check
          %p209 = pneg %p63
        $region14: #{neupix_forward.1} parent=11 // pred_check_branch
          %211 = sbr.rel (%p209) target = $region16
        $region15: #{neupix_forward.1} parent=11 // pred_region
          _
        $region16: #{neupix_forward.1} parent=11 // pred_fallthru
          _
        // Predicated region
        $region17: #{neupix_forward.1} parent=11 // pred_check
          %p212 = pneg %p84
        $region18: #{neupix_forward.1} parent=11 // pred_check_branch
          %214 = sbr.rel (%p212) target = $region20
        $region19: #{neupix_forward.1} parent=11 // pred_region
          _
        $region20: #{neupix_forward.1} parent=11 // pred_fallthru
          _
        // Predicated region
        $region21: #{neupix_forward.1} parent=11 // pred_check
          %p215 = pneg %p105
        $region22: #{neupix_forward.1} parent=11 // pred_check_branch
          %217 = sbr.rel (%p215) target = $region24
        $region23: #{neupix_forward.1} parent=11 // pred_region
          _
        $region24: #{neupix_forward.1} parent=11 // pred_fallthru
          _
        // Predicated region
        $region25: #{neupix_forward.1} parent=11 // pred_check
          %p218 = pneg %p126
        $region26: #{neupix_forward.1} parent=11 // pred_check_branch
          %220 = sbr.rel (%p218) target = $region28
        $region27: #{neupix_forward.1} parent=11 // pred_region
          _
        $region28: #{neupix_forward.1} parent=11 // pred_fallthru
          _
        // Predicated region
        $region29: #{neupix_forward.1} parent=11 // pred_check
          %p221 = pneg %p147
        $region30: #{neupix_forward.1} parent=11 // pred_check_branch
          %223 = sbr.rel (%p221) target = $region32
        $region31: #{neupix_forward.1} parent=11 // pred_region
          _
        $region32: #{neupix_forward.1} parent=11 // pred_fallthru
          _
        // Predicated region
        $region33: #{neupix_forward.1} parent=11 // pred_check
          %p224 = pneg %p168
        $region34: #{neupix_forward.1} parent=11 // pred_check_branch
          %226 = sbr.rel (%p224) target = $region36
        $region35: #{neupix_forward.1} parent=11 // pred_region
          _
        $region36: #{neupix_forward.1} parent=11 // pred_fallthru
          _
      $region12: #{neupix_forward.1} parent=5 // pred_fallthru
        _
      %p227 = scmp.lt.s32.totalorder %s16, 2
      // Predicated region
      $region37: #{neupix_forward.1} parent=5 // pred_check
        %p228 = pneg %p227
      $region38: #{neupix_forward.1} parent=5 // pred_check_branch
        %230 = sbr.rel (%p228) target = $region40
      $region39: #{neupix_forward.1} parent=5 // pred_region
        // Predicated region
        $region41: #{neupix_forward.1} parent=39 // pred_check
          %p231 = pneg %p36
        $region42: #{neupix_forward.1} parent=39 // pred_check_branch
          %233 = sbr.rel (%p231) target = $region44
        $region43: #{neupix_forward.1} parent=39 // pred_region
          %s234 = smul.u32 4, %s16
          %p235 = scmp.lt.s32.totalorder %s234, 7
          %s236 = scalar_select %p235, %s234, 7
          %s237 = smul.addr %s236, 2
          %s238 = scalar_lea.vmem %s0, %s237
          %s239 = smul.u32 4, %s16
        $region44: #{neupix_forward.1} parent=39 // pred_fallthru
          _
      $region40: #{neupix_forward.1} parent=5 // pred_fallthru
        _
      %p240 = scmp.le.s32.totalorder 1, %s16
      %p241 = scmp.lt.s32.totalorder %s16, 3
      %p242 = pnand %p240, %p241
      %p243 = pneg %p242
      // Predicated region
      $region45: #{neupix_forward.1} parent=5 // pred_check
        _
      $region46: #{neupix_forward.1} parent=5 // pred_check_branch
        %245 = sbr.rel (%p242) target = $region48
      $region47: #{neupix_forward.1} parent=5 // pred_region
        %s246 = ssub.s32 %s16, 1
        %s247 = smul.u32 4, %s21
        %p248 = scmp.lt.s32.totalorder %s247, 7
        %s249 = scalar_select %p248, %s247, 7
        %s250 = smul.addr %s249, 2
        %s251 = scalar_lea.vmem %s0, %s250
        %p252 = pneg %p42
        %p253 = pneg %p39
        %p254 = pneg %p63
        %p255 = pneg %p60
        %p256 = pneg %p84
        %p257 = pneg %p81
        %p258 = pneg %p105
        %p259 = pneg %p102
        %p260 = pneg %p126
        %p261 = pneg %p123
        %p262 = pneg %p147
        %p263 = pneg %p144
        %p264 = pneg %p168
        %p265 = pneg %p165
        %p266 = pneg %p194
        %p267 = pneg %p191
        %s268 = sand.u32 %s181, 1
        %s269 = scalar_lea.sflag [#allocation3], %s268
        %s270 = sand.u32 %s181, 1
        %s271 = smul.addr %s270, 16
        %s272 = scalar_lea.vmem [#allocation2], %s271
        %s273 = smul.u32 4, %s21
        %p274 = scmp.lt.s32.totalorder %s273, 7
        %s275 = scalar_select %p274, %s273, 7
        %s276 = smul.addr %s275, 2
        %s277 = scalar_lea.vmem %s0, %s276
        %s278 = smul.u32 4, %s21
        %s279 = smul.u32 4, %s21
        %v281 = vld [vmem:[%s277] sm:$0xff]
        %v282 = vmul.f32 %v281, 3.1415927
        %v283 = vand.u32 2147483647, %v282
        %vm284 = vcmp.le.f32.partialorder %v283, 0.7853982
        %vm285 = vcmp.lt.s32.totalorder %v282, 0
        %v286 = vand.u32 %v282, 2139095040
        %v287 = vshrl.u32 %v286, 23
        %v288 = vsub.s32 %v287, 127
        %v289 = vand.u32 2147483647, %v282
        %v290 = vand.u32 %v289, 8388607
        %v291 = vor.u32 %v290, 8388608
        %v292 = vsub.s32 0, %v291
        %v293 = vadd.s32 %v288, 1
        %vm294 = vcmp.gt.s32.totalorder %v293, 0
        %v295 = vsel %vm294, %v293, 0
        %v296 = vshrl.u32 %v295, 5
        %v297 = vand.u32 %v295, 31
        %v298 = vsub.s32 32, %v297
        %v299 = vshrl.u32 683565275, %v298
        %v300 = vshll.u32 683565275, %v297
        %v301 = vshrl.u32 2475754826, %v298
        %v302 = vor.u32 %v300, %v301
        %v303 = vshll.u32 2475754826, %v297
        %v304 = vshrl.u32 2131351028, %v298
        %v305 = vor.u32 %v303, %v304
        %v306 = vshll.u32 2131351028, %v297
        %v307 = vshrl.u32 2102212464, %v298
        %v308 = vor.u32 %v306, %v307
        %v309 = vshll.u32 2102212464, %v297
        %v310 = vshrl.u32 920167782, %v298
        %v311 = vor.u32 %v309, %v310
        %v312 = vshll.u32 920167782, %v297
        %v313 = vshrl.u32 1326507024, %v298
        %v314 = vor.u32 %v312, %v313
        %vm315 = vcmp.lt.s32.totalorder %v296, 1
        %vm316 = vcmp.lt.s32.totalorder %v296, 2
        %vm317 = vcmp.lt.s32.totalorder %v296, 3
        %vm318 = vcmp.lt.s32.totalorder %v296, 4
        %v319 = vsel %vm315, %v299, %v302
        %v320 = vsel %vm318, %v308, 2102212464
        %v321 = vsel %vm317, %v305, %v320
        %v322 = vsel %vm316, %v319, %v321
        %v323 = vsel %vm315, %v302, %v305
        %v324 = vsel %vm318, %v311, 920167782
        %v325 = vsel %vm317, %v308, %v324
        %v326 = vsel %vm316, %v323, %v325
        %v327 = vsel %vm315, %v305, %v308
        %v328 = vsel %vm318, %v314, 1326507024
        %v329 = vsel %vm317, %v311, %v328
        %v330 = vsel %vm316, %v327, %v329
        %v331 = vshll.u32 %v291, 8
        %v332 = vmul.u32.u64.compose %v331, %v330
        %v333 = vextract.low.u32 %v332
        %v334 = vextract.high.u32 %v332
        %v335 = vmul.u32.u64.compose %v331, %v326
        %v336 = vextract.low.u32 %v335
        %v337 = vextract.high.u32 %v335
        %v338 = vmul.u32 %v331, %v322
        %v339 = vadd.s32 %v334, %v336
        %vm340 = vc.u32 %v334, %v336
        %v341 = vadd.s32 %v337, 1
        %v342 = vsel %vm340, %v341, %v337
        %v343 = vadd.s32 %v338, %v342
        %v344 = vadd.s32 %v343, 536870912
        %v345 = vshrl.u32 %v344, 30
        %v346 = vshll.u32 %v345, 30
        %v347 = vsub.s32 %v343, %v346
        %vm348 = vcmp.lt.s32.totalorder %v347, 0
        %v349 = vsub.s32 0, %v347
        %v350 = vsel %vm348, %v349, %v347
        %v351 = vclz %v350
        %v352 = vsub.s32 %v351, 2
        %vm353 = vcmp.gt.s32.totalorder 0, %v352
        %v354 = vsel %vm353, 0, %v352
        %v355 = vsub.s32 32, %v354
        %v356 = vshll.u32 %v347, %v354
        %v357 = vshrl.u32 %v339, %v355
        %v358 = vor.u32 %v356, %v357
        %v359 = vsub.s32 4294967266, %v354
        %v360 = vadd.s32 %v359, 127
        %v361 = vshll.u32 %v360, 23
        %v362 = vor.u32 4788187, %v361
        %v363 = vand.u32 2147483647, %v362
        %v365 = vcvt.s32.f32 %v358
        %v366 = vmul.f32 %v365, %v363
        %v367 = vxor.u32 %v366, 2147483648
        %v368 = vsel %vm285, %v367, %v366
        %v369 = vsub.s32 4, %v345
        %v370 = vsel %vm285, %v369, %v345
        %v371 = vsel %vm284, %v282, %v368
        %v372 = vsel %vm284, 0, %v370
        %v373 = vcosq.f32.pop %v371
        %v374 = vsinq.f32.pop %v371
        %vm375 = vweird.f32 %v282
        %v376 = vadd.s32 %v372, 3
        %v377 = vand.u32 %v376, 3
        %vm378 = vcmp.lt.s32.totalorder %v377, 2
        %vm379 = vcmp.eq.s32.totalorder %v377, 0
        %v380 = vxor.u32 %v374, 2147483648
        %v381 = vsel %vm379, %v373, %v380
        %vm382 = vcmp.eq.s32.totalorder %v377, 2
        %v383 = vxor.u32 %v373, 2147483648
        %v384 = vsel %vm382, %v383, %v374
        %v385 = vsel %vm378, %v381, %v384
        %v386 = vsel %vm375, nan, %v385
        %v387 = vand.u32 2147483647, %v282
        %vm388 = vcmp.le.f32.partialorder %v387, 0.7853982
        %vm389 = vcmp.lt.s32.totalorder %v282, 0
        %v390 = vand.u32 %v282, 2139095040
        %v391 = vshrl.u32 %v390, 23
        %v392 = vsub.s32 %v391, 127
        %v393 = vand.u32 2147483647, %v282
        %v394 = vand.u32 %v393, 8388607
        %v395 = vor.u32 %v394, 8388608
        %v396 = vsub.s32 0, %v395
        %v397 = vadd.s32 %v392, 1
        %vm398 = vcmp.gt.s32.totalorder %v397, 0
        %v399 = vsel %vm398, %v397, 0
        %v400 = vshrl.u32 %v399, 5
        %v401 = vand.u32 %v399, 31
        %v402 = vsub.s32 32, %v401
        %v403 = vshrl.u32 683565275, %v402
        %v404 = vshll.u32 683565275, %v401
        %v405 = vshrl.u32 2475754826, %v402
        %v406 = vor.u32 %v404, %v405
        %v407 = vshll.u32 2475754826, %v401
        %v408 = vshrl.u32 2131351028, %v402
        %v409 = vor.u32 %v407, %v408
        %v410 = vshll.u32 2131351028, %v401
        %v411 = vshrl.u32 2102212464, %v402
        %v412 = vor.u32 %v410, %v411
        %v413 = vshll.u32 2102212464, %v401
        %v414 = vshrl.u32 920167782, %v402
        %v415 = vor.u32 %v413, %v414
        %v416 = vshll.u32 920167782, %v401
        %v417 = vshrl.u32 1326507024, %v402
        %v418 = vor.u32 %v416, %v417
        %vm419 = vcmp.lt.s32.totalorder %v400, 1
        %vm420 = vcmp.lt.s32.totalorder %v400, 2
        %vm421 = vcmp.lt.s32.totalorder %v400, 3
        %vm422 = vcmp.lt.s32.totalorder %v400, 4
        %v423 = vsel %vm419, %v403, %v406
        %v424 = vsel %vm422, %v412, 2102212464
        %v425 = vsel %vm421, %v409, %v424
        %v426 = vsel %vm420, %v423, %v425
        %v427 = vsel %vm419, %v406, %v409
        %v428 = vsel %vm422, %v415, 920167782
        %v429 = vsel %vm421, %v412, %v428
        %v430 = vsel %vm420, %v427, %v429
        %v431 = vsel %vm419, %v409, %v412
        %v432 = vsel %vm422, %v418, 1326507024
        %v433 = vsel %vm421, %v415, %v432
        %v434 = vsel %vm420, %v431, %v433
        %v435 = vshll.u32 %v395, 8
        %v436 = vmul.u32.u64.compose %v435, %v434
        %v437 = vextract.low.u32 %v436
        %v438 = vextract.high.u32 %v436
        %v439 = vmul.u32.u64.compose %v435, %v430
        %v440 = vextract.low.u32 %v439
        %v441 = vextract.high.u32 %v439
        %v442 = vmul.u32 %v435, %v426
        %v443 = vadd.s32 %v438, %v440
        %vm444 = vc.u32 %v438, %v440
        %v445 = vadd.s32 %v441, 1
        %v446 = vsel %vm444, %v445, %v441
        %v447 = vadd.s32 %v442, %v446
        %v448 = vadd.s32 %v447, 536870912
        %v449 = vshrl.u32 %v448, 30
        %v450 = vshll.u32 %v449, 30
        %v451 = vsub.s32 %v447, %v450
        %vm452 = vcmp.lt.s32.totalorder %v451, 0
        %v453 = vsub.s32 0, %v451
        %v454 = vsel %vm452, %v453, %v451
        %v455 = vclz %v454
        %v456 = vsub.s32 %v455, 2
        %vm457 = vcmp.gt.s32.totalorder 0, %v456
        %v458 = vsel %vm457, 0, %v456
        %v459 = vsub.s32 32, %v458
        %v460 = vshll.u32 %v451, %v458
        %v461 = vshrl.u32 %v443, %v459
        %v462 = vor.u32 %v460, %v461
        %v463 = vsub.s32 4294967266, %v458
        %v464 = vadd.s32 %v463, 127
        %v465 = vshll.u32 %v464, 23
        %v466 = vor.u32 4788187, %v465
        %v467 = vand.u32 2147483647, %v466
        %v469 = vcvt.s32.f32 %v462
        %v470 = vmul.f32 %v469, %v467
        %v471 = vxor.u32 %v470, 2147483648
        %v472 = vsel %vm389, %v471, %v470
        %v473 = vsub.s32 4, %v449
        %v474 = vsel %vm389, %v473, %v449
        %v475 = vsel %vm388, %v282, %v472
        %v476 = vsel %vm388, 0, %v474
        %v477 = vcosq.f32.pop %v475
        %v478 = vsinq.f32.pop %v475
        %vm479 = vweird.f32 %v282
        %v480 = vand.u32 %v476, 3
        %vm481 = vcmp.lt.s32.totalorder %v480, 2
        %vm482 = vcmp.eq.s32.totalorder %v480, 0
        %v483 = vxor.u32 %v478, 2147483648
        %v484 = vsel %vm482, %v477, %v483
        %vm485 = vcmp.eq.s32.totalorder %v480, 2
        %v486 = vxor.u32 %v477, 2147483648
        %v487 = vsel %vm485, %v486, %v478
        %v488 = vsel %vm481, %v484, %v487
        %v489 = vsel %vm479, nan, %v488
        %v490 = vmul.f32 %v386, 2.0
        %v491 = vmul.f32 %v490, %v489
        %v492 = vmul.f32 %v490, %v386
        %v493 = vsub.f32 1.0, %v492
        %v494 = vmul.f32 %v491, 2.0
        %v495 = vmul.f32 %v494, %v493
        %v496 = vmul.f32 %v494, %v491
        %v497 = vsub.f32 1.0, %v496
        %v498 = vmul.f32 %v495, 2.0
        %v499 = vmul.f32 %v498, %v497
        %v500 = vmul.f32 %v498, %v495
        %v501 = vsub.f32 1.0, %v500
        %v502 = vmul.f32 %v499, 2.0
        %v503 = vmul.f32 %v502, %v501
        %v504 = vmul.f32 %v502, %v499
        %v505 = vsub.f32 1.0, %v504
        %v506 = vmul.f32 %v503, 2.0
        %v507 = vmul.f32 %v506, %v505
        %v508 = vmul.f32 %v506, %v503
        %v509 = vsub.f32 1.0, %v508
        %v510 = vmul.f32 %v507, 2.0
        %v511 = vmul.f32 %v510, %v509
        %v512 = vmul.f32 %v510, %v507
        %v513 = vsub.f32 1.0, %v512
        %v514 = vmul.f32 %v511, 2.0
        %v515 = vmul.f32 %v514, %v513
        %v516 = vmul.f32 %v514, %v511
        %v517 = vsub.f32 1.0, %v516
        %v518 = vmul.f32 %v515, 2.0
        %v519 = vmul.f32 %v518, %v517
        %v520 = vmul.f32 %v518, %v515
        %v521 = vsub.f32 1.0, %v520
        %v522 = vmul.f32 %v519, 2.0
        %v523 = vmul.f32 %v522, %v521
        %v524 = vmul.f32 %v522, %v519
        %v525 = vsub.f32 1.0, %v524
        %v527 = vlaneseq
        %v528 = vshrl.u32 %v527, 7
        %v529 = vsub.s32 0, %v528
        %v530 = vrot.slane %v386, %v529
        %v531 = vlaneseq
        %v532 = vshrl.u32 %v531, 7
        %v533 = vsub.s32 2, %v532
        %v534 = vrot.slane %v386, %v533
        %v535 = vlaneseq
        %v536 = vshrl.u32 %v535, 7
        %v537 = vsub.s32 4, %v536
        %v538 = vrot.slane %v386, %v537
        %v539 = vlaneseq
        %v540 = vshrl.u32 %v539, 7
        %v541 = vsub.s32 6, %v540
        %v542 = vrot.slane %v386, %v541
        %v548 = vlaneseq
        %v549 = vshrl.u32 %v548, 7
        %v550 = vsub.s32 0, %v549
        %v551 = vrot.slane %v491, %v550
        %v552 = vlaneseq
        %v553 = vshrl.u32 %v552, 7
        %v554 = vsub.s32 2, %v553
        %v555 = vrot.slane %v491, %v554
        %v556 = vlaneseq
        %v557 = vshrl.u32 %v556, 7
        %v558 = vsub.s32 4, %v557
        %v559 = vrot.slane %v491, %v558
        %v560 = vlaneseq
        %v561 = vshrl.u32 %v560, 7
        %v562 = vsub.s32 6, %v561
        %v563 = vrot.slane %v491, %v562
        %v569 = vlaneseq
        %v570 = vshrl.u32 %v569, 7
        %v571 = vsub.s32 0, %v570
        %v572 = vrot.slane %v495, %v571
        %v573 = vlaneseq
        %v574 = vshrl.u32 %v573, 7
        %v575 = vsub.s32 2, %v574
        %v576 = vrot.slane %v495, %v575
        %v577 = vlaneseq
        %v578 = vshrl.u32 %v577, 7
        %v579 = vsub.s32 4, %v578
        %v580 = vrot.slane %v495, %v579
        %v581 = vlaneseq
        %v582 = vshrl.u32 %v581, 7
        %v583 = vsub.s32 6, %v582
        %v584 = vrot.slane %v495, %v583
        %v590 = vlaneseq
        %v591 = vshrl.u32 %v590, 7
        %v592 = vsub.s32 0, %v591
        %v593 = vrot.slane %v499, %v592
        %v594 = vlaneseq
        %v595 = vshrl.u32 %v594, 7
        %v596 = vsub.s32 2, %v595
        %v597 = vrot.slane %v499, %v596
        %v598 = vlaneseq
        %v599 = vshrl.u32 %v598, 7
        %v600 = vsub.s32 4, %v599
        %v601 = vrot.slane %v499, %v600
        %v602 = vlaneseq
        %v603 = vshrl.u32 %v602, 7
        %v604 = vsub.s32 6, %v603
        %v605 = vrot.slane %v499, %v604
        %v611 = vlaneseq
        %v612 = vshrl.u32 %v611, 7
        %v613 = vsub.s32 0, %v612
        %v614 = vrot.slane %v503, %v613
        %v615 = vlaneseq
        %v616 = vshrl.u32 %v615, 7
        %v617 = vsub.s32 2, %v616
        %v618 = vrot.slane %v503, %v617
        %v619 = vlaneseq
        %v620 = vshrl.u32 %v619, 7
        %v621 = vsub.s32 4, %v620
        %v622 = vrot.slane %v503, %v621
        %v623 = vlaneseq
        %v624 = vshrl.u32 %v623, 7
        %v625 = vsub.s32 6, %v624
        %v626 = vrot.slane %v503, %v625
        %v632 = vlaneseq
        %v633 = vshrl.u32 %v632, 7
        %v634 = vsub.s32 0, %v633
        %v635 = vrot.slane %v507, %v634
        %v636 = vlaneseq
        %v637 = vshrl.u32 %v636, 7
        %v638 = vsub.s32 2, %v637
        %v639 = vrot.slane %v507, %v638
        %v640 = vlaneseq
        %v641 = vshrl.u32 %v640, 7
        %v642 = vsub.s32 4, %v641
        %v643 = vrot.slane %v507, %v642
        %v644 = vlaneseq
        %v645 = vshrl.u32 %v644, 7
        %v646 = vsub.s32 6, %v645
        %v647 = vrot.slane %v507, %v646
        %v653 = vlaneseq
        %v654 = vshrl.u32 %v653, 7
        %v655 = vsub.s32 0, %v654
        %v656 = vrot.slane %v511, %v655
        %v657 = vlaneseq
        %v658 = vshrl.u32 %v657, 7
        %v659 = vsub.s32 2, %v658
        %v660 = vrot.slane %v511, %v659
        %v661 = vlaneseq
        %v662 = vshrl.u32 %v661, 7
        %v663 = vsub.s32 4, %v662
        %v664 = vrot.slane %v511, %v663
        %v665 = vlaneseq
        %v666 = vshrl.u32 %v665, 7
        %v667 = vsub.s32 6, %v666
        %v668 = vrot.slane %v511, %v667
        %v674 = vlaneseq
        %v675 = vshrl.u32 %v674, 7
        %v676 = vsub.s32 0, %v675
        %v677 = vrot.slane %v515, %v676
        %v678 = vlaneseq
        %v679 = vshrl.u32 %v678, 7
        %v680 = vsub.s32 2, %v679
        %v681 = vrot.slane %v515, %v680
        %v682 = vlaneseq
        %v683 = vshrl.u32 %v682, 7
        %v684 = vsub.s32 4, %v683
        %v685 = vrot.slane %v515, %v684
        %v686 = vlaneseq
        %v687 = vshrl.u32 %v686, 7
        %v688 = vsub.s32 6, %v687
        %v689 = vrot.slane %v515, %v688
        %v695 = vlaneseq
        %v696 = vshrl.u32 %v695, 7
        %v697 = vsub.s32 0, %v696
        %v698 = vrot.slane %v519, %v697
        %v699 = vlaneseq
        %v700 = vshrl.u32 %v699, 7
        %v701 = vsub.s32 2, %v700
        %v702 = vrot.slane %v519, %v701
        %v703 = vlaneseq
        %v704 = vshrl.u32 %v703, 7
        %v705 = vsub.s32 4, %v704
        %v706 = vrot.slane %v519, %v705
        %v707 = vlaneseq
        %v708 = vshrl.u32 %v707, 7
        %v709 = vsub.s32 6, %v708
        %v710 = vrot.slane %v519, %v709
        %v716 = vlaneseq
        %v717 = vshrl.u32 %v716, 7
        %v718 = vsub.s32 0, %v717
        %v719 = vrot.slane %v523, %v718
        %v720 = vlaneseq
        %v721 = vshrl.u32 %v720, 7
        %v722 = vsub.s32 2, %v721
        %v723 = vrot.slane %v523, %v722
        %v724 = vlaneseq
        %v725 = vshrl.u32 %v724, 7
        %v726 = vsub.s32 4, %v725
        %v727 = vrot.slane %v523, %v726
        %v728 = vlaneseq
        %v729 = vshrl.u32 %v728, 7
        %v730 = vsub.s32 6, %v729
        %v731 = vrot.slane %v523, %v730
        %v737 = vlaneseq
        %v738 = vshrl.u32 %v737, 7
        %v739 = vsub.s32 0, %v738
        %v740 = vrot.slane %v489, %v739
        %v741 = vlaneseq
        %v742 = vshrl.u32 %v741, 7
        %v743 = vsub.s32 2, %v742
        %v744 = vrot.slane %v489, %v743
        %v745 = vlaneseq
        %v746 = vshrl.u32 %v745, 7
        %v747 = vsub.s32 4, %v746
        %v748 = vrot.slane %v489, %v747
        %v749 = vlaneseq
        %v750 = vshrl.u32 %v749, 7
        %v751 = vsub.s32 6, %v750
        %v752 = vrot.slane %v489, %v751
        %v758 = vlaneseq
        %v759 = vshrl.u32 %v758, 7
        %v760 = vsub.s32 0, %v759
        %v761 = vrot.slane %v493, %v760
        %v762 = vlaneseq
        %v763 = vshrl.u32 %v762, 7
        %v764 = vsub.s32 2, %v763
        %v765 = vrot.slane %v493, %v764
        %v766 = vlaneseq
        %v767 = vshrl.u32 %v766, 7
        %v768 = vsub.s32 4, %v767
        %v769 = vrot.slane %v493, %v768
        %v770 = vlaneseq
        %v771 = vshrl.u32 %v770, 7
        %v772 = vsub.s32 6, %v771
        %v773 = vrot.slane %v493, %v772
        %v779 = vlaneseq
        %v780 = vshrl.u32 %v779, 7
        %v781 = vsub.s32 0, %v780
        %v782 = vrot.slane %v497, %v781
        %v783 = vlaneseq
        %v784 = vshrl.u32 %v783, 7
        %v785 = vsub.s32 2, %v784
        %v786 = vrot.slane %v497, %v785
        %v787 = vlaneseq
        %v788 = vshrl.u32 %v787, 7
        %v789 = vsub.s32 4, %v788
        %v790 = vrot.slane %v497, %v789
        %v791 = vlaneseq
        %v792 = vshrl.u32 %v791, 7
        %v793 = vsub.s32 6, %v792
        %v794 = vrot.slane %v497, %v793
        %v800 = vlaneseq
        %v801 = vshrl.u32 %v800, 7
        %v802 = vsub.s32 0, %v801
        %v803 = vrot.slane %v501, %v802
        %v804 = vlaneseq
        %v805 = vshrl.u32 %v804, 7
        %v806 = vsub.s32 2, %v805
        %v807 = vrot.slane %v501, %v806
        %v808 = vlaneseq
        %v809 = vshrl.u32 %v808, 7
        %v810 = vsub.s32 4, %v809
        %v811 = vrot.slane %v501, %v810
        %v812 = vlaneseq
        %v813 = vshrl.u32 %v812, 7
        %v814 = vsub.s32 6, %v813
        %v815 = vrot.slane %v501, %v814
        %v821 = vlaneseq
        %v822 = vshrl.u32 %v821, 7
        %v823 = vsub.s32 0, %v822
        %v824 = vrot.slane %v505, %v823
        %v825 = vlaneseq
        %v826 = vshrl.u32 %v825, 7
        %v827 = vsub.s32 2, %v826
        %v828 = vrot.slane %v505, %v827
        %v829 = vlaneseq
        %v830 = vshrl.u32 %v829, 7
        %v831 = vsub.s32 4, %v830
        %v832 = vrot.slane %v505, %v831
        %v833 = vlaneseq
        %v834 = vshrl.u32 %v833, 7
        %v835 = vsub.s32 6, %v834
        %v836 = vrot.slane %v505, %v835
        %v842 = vlaneseq
        %v843 = vshrl.u32 %v842, 7
        %v844 = vsub.s32 0, %v843
        %v845 = vrot.slane %v509, %v844
        %v846 = vlaneseq
        %v847 = vshrl.u32 %v846, 7
        %v848 = vsub.s32 2, %v847
        %v849 = vrot.slane %v509, %v848
        %v850 = vlaneseq
        %v851 = vshrl.u32 %v850, 7
        %v852 = vsub.s32 4, %v851
        %v853 = vrot.slane %v509, %v852
        %v854 = vlaneseq
        %v855 = vshrl.u32 %v854, 7
        %v856 = vsub.s32 6, %v855
        %v857 = vrot.slane %v509, %v856
        %vm862 = vcmask 1040384
        %v863 = vsel %vm862, %v530, %v551
        %v864 = vsel %vm862, %v534, %v555
        %v865 = vsel %vm862, %v538, %v559
        %v866 = vsel %vm862, %v542, %v563
        %vm867 = vcmask 1041408
        %v868 = vsel %vm867, %v863, %v572
        %v869 = vsel %vm867, %v864, %v576
        %v870 = vsel %vm867, %v865, %v580
        %v871 = vsel %vm867, %v866, %v584
        %vm872 = vcmask 1042432
        %v873 = vsel %vm872, %v868, %v593
        %v874 = vsel %vm872, %v869, %v597
        %v875 = vsel %vm872, %v870, %v601
        %v876 = vsel %vm872, %v871, %v605
        %vm877 = vcmask 1043456
        %v878 = vsel %vm877, %v873, %v614
        %v879 = vsel %vm877, %v874, %v618
        %v880 = vsel %vm877, %v875, %v622
        %v881 = vsel %vm877, %v876, %v626
        %vm882 = vcmask 1044480
        %v883 = vsel %vm882, %v878, %v635
        %v884 = vsel %vm882, %v879, %v639
        %v885 = vsel %vm882, %v880, %v643
        %v886 = vsel %vm882, %v881, %v647
        %vm887 = vcmask 1045504
        %v888 = vsel %vm887, %v883, %v656
        %v889 = vsel %vm887, %v884, %v660
        %v890 = vsel %vm887, %v885, %v664
        %v891 = vsel %vm887, %v886, %v668
        %vm892 = vcmask 1046528
        %v893 = vsel %vm892, %v888, %v677
        %v894 = vsel %vm892, %v889, %v681
        %v895 = vsel %vm892, %v890, %v685
        %v896 = vsel %vm892, %v891, %v689
        %v897 = vsel %vm862, %v698, %v719
        %v898 = vsel %vm862, %v702, %v723
        %v899 = vsel %vm862, %v706, %v727
        %v900 = vsel %vm862, %v710, %v731
        %v901 = vsel %vm867, %v897, %v740
        %v902 = vsel %vm867, %v898, %v744
        %v903 = vsel %vm867, %v899, %v748
        %v904 = vsel %vm867, %v900, %v752
        %v905 = vsel %vm872, %v901, %v761
        %v906 = vsel %vm872, %v902, %v765
        %v907 = vsel %vm872, %v903, %v769
        %v908 = vsel %vm872, %v904, %v773
        %v909 = vsel %vm877, %v905, %v782
        %v910 = vsel %vm877, %v906, %v786
        %v911 = vsel %vm877, %v907, %v790
        %v912 = vsel %vm877, %v908, %v794
        %v913 = vsel %vm882, %v909, %v803
        %v914 = vsel %vm882, %v910, %v807
        %v915 = vsel %vm882, %v911, %v811
        %v916 = vsel %vm882, %v912, %v815
        %v917 = vsel %vm887, %v913, %v824
        %v918 = vsel %vm887, %v914, %v828
        %v919 = vsel %vm887, %v915, %v832
        %v920 = vsel %vm887, %v916, %v836
        %v921 = vsel %vm892, %v917, %v845
        %v922 = vsel %vm892, %v918, %v849
        %v923 = vsel %vm892, %v919, %v853
        %v924 = vsel %vm892, %v920, %v857
        %v926 = vlaneseq
        %v927 = vshrl.u32 %v926, 7
        %v928 = vsub.s32 0, %v927
        %v929 = vrot.slane %v513, %v928
        %v930 = vlaneseq
        %v931 = vshrl.u32 %v930, 7
        %v932 = vsub.s32 2, %v931
        %v933 = vrot.slane %v513, %v932
        %v934 = vlaneseq
        %v935 = vshrl.u32 %v934, 7
        %v936 = vsub.s32 4, %v935
        %v937 = vrot.slane %v513, %v936
        %v938 = vlaneseq
        %v939 = vshrl.u32 %v938, 7
        %v940 = vsub.s32 6, %v939
        %v941 = vrot.slane %v513, %v940
        %v947 = vlaneseq
        %v948 = vshrl.u32 %v947, 7
        %v949 = vsub.s32 0, %v948
        %v950 = vrot.slane %v517, %v949
        %v951 = vlaneseq
        %v952 = vshrl.u32 %v951, 7
        %v953 = vsub.s32 2, %v952
        %v954 = vrot.slane %v517, %v953
        %v955 = vlaneseq
        %v956 = vshrl.u32 %v955, 7
        %v957 = vsub.s32 4, %v956
        %v958 = vrot.slane %v517, %v957
        %v959 = vlaneseq
        %v960 = vshrl.u32 %v959, 7
        %v961 = vsub.s32 6, %v960
        %v962 = vrot.slane %v517, %v961
        %v968 = vlaneseq
        %v969 = vshrl.u32 %v968, 7
        %v970 = vsub.s32 0, %v969
        %v971 = vrot.slane %v521, %v970
        %v972 = vlaneseq
        %v973 = vshrl.u32 %v972, 7
        %v974 = vsub.s32 2, %v973
        %v975 = vrot.slane %v521, %v974
        %v976 = vlaneseq
        %v977 = vshrl.u32 %v976, 7
        %v978 = vsub.s32 4, %v977
        %v979 = vrot.slane %v521, %v978
        %v980 = vlaneseq
        %v981 = vshrl.u32 %v980, 7
        %v982 = vsub.s32 6, %v981
        %v983 = vrot.slane %v521, %v982
        %v989 = vlaneseq
        %v990 = vshrl.u32 %v989, 7
        %v991 = vsub.s32 0, %v990
        %v992 = vrot.slane %v525, %v991
        %v993 = vlaneseq
        %v994 = vshrl.u32 %v993, 7
        %v995 = vsub.s32 2, %v994
        %v996 = vrot.slane %v525, %v995
        %v997 = vlaneseq
        %v998 = vshrl.u32 %v997, 7
        %v999 = vsub.s32 4, %v998
        %v1000 = vrot.slane %v525, %v999
        %v1001 = vlaneseq
        %v1002 = vshrl.u32 %v1001, 7
        %v1003 = vsub.s32 6, %v1002
        %v1004 = vrot.slane %v525, %v1003
        %v1009 = vlaneseq
        %v1010 = vshrl.u32 %v1009, 7
        %v1011 = vsub.s32 1, %v1010
        %v1012 = vrot.slane %v386, %v1011
        %v1013 = vlaneseq
        %v1014 = vshrl.u32 %v1013, 7
        %v1015 = vsub.s32 3, %v1014
        %v1016 = vrot.slane %v386, %v1015
        %v1017 = vlaneseq
        %v1018 = vshrl.u32 %v1017, 7
        %v1019 = vsub.s32 5, %v1018
        %v1020 = vrot.slane %v386, %v1019
        %v1021 = vlaneseq
        %v1022 = vshrl.u32 %v1021, 7
        %v1023 = vsub.s32 7, %v1022
        %v1024 = vrot.slane %v386, %v1023
        %v1029 = vlaneseq
        %v1030 = vshrl.u32 %v1029, 7
        %v1031 = vsub.s32 1, %v1030
        %v1032 = vrot.slane %v491, %v1031
        %v1033 = vlaneseq
        %v1034 = vshrl.u32 %v1033, 7
        %v1035 = vsub.s32 3, %v1034
        %v1036 = vrot.slane %v491, %v1035
        %v1037 = vlaneseq
        %v1038 = vshrl.u32 %v1037, 7
        %v1039 = vsub.s32 5, %v1038
        %v1040 = vrot.slane %v491, %v1039
        %v1041 = vlaneseq
        %v1042 = vshrl.u32 %v1041, 7
        %v1043 = vsub.s32 7, %v1042
        %v1044 = vrot.slane %v491, %v1043
        %v1049 = vlaneseq
        %v1050 = vshrl.u32 %v1049, 7
        %v1051 = vsub.s32 1, %v1050
        %v1052 = vrot.slane %v495, %v1051
        %v1053 = vlaneseq
        %v1054 = vshrl.u32 %v1053, 7
        %v1055 = vsub.s32 3, %v1054
        %v1056 = vrot.slane %v495, %v1055
        %v1057 = vlaneseq
        %v1058 = vshrl.u32 %v1057, 7
        %v1059 = vsub.s32 5, %v1058
        %v1060 = vrot.slane %v495, %v1059
        %v1061 = vlaneseq
        %v1062 = vshrl.u32 %v1061, 7
        %v1063 = vsub.s32 7, %v1062
        %v1064 = vrot.slane %v495, %v1063
        %v1069 = vlaneseq
        %v1070 = vshrl.u32 %v1069, 7
        %v1071 = vsub.s32 1, %v1070
        %v1072 = vrot.slane %v499, %v1071
        %v1073 = vlaneseq
        %v1074 = vshrl.u32 %v1073, 7
        %v1075 = vsub.s32 3, %v1074
        %v1076 = vrot.slane %v499, %v1075
        %v1077 = vlaneseq
        %v1078 = vshrl.u32 %v1077, 7
        %v1079 = vsub.s32 5, %v1078
        %v1080 = vrot.slane %v499, %v1079
        %v1081 = vlaneseq
        %v1082 = vshrl.u32 %v1081, 7
        %v1083 = vsub.s32 7, %v1082
        %v1084 = vrot.slane %v499, %v1083
        %v1089 = vlaneseq
        %v1090 = vshrl.u32 %v1089, 7
        %v1091 = vsub.s32 1, %v1090
        %v1092 = vrot.slane %v503, %v1091
        %v1093 = vlaneseq
        %v1094 = vshrl.u32 %v1093, 7
        %v1095 = vsub.s32 3, %v1094
        %v1096 = vrot.slane %v503, %v1095
        %v1097 = vlaneseq
        %v1098 = vshrl.u32 %v1097, 7
        %v1099 = vsub.s32 5, %v1098
        %v1100 = vrot.slane %v503, %v1099
        %v1101 = vlaneseq
        %v1102 = vshrl.u32 %v1101, 7
        %v1103 = vsub.s32 7, %v1102
        %v1104 = vrot.slane %v503, %v1103
        %v1109 = vlaneseq
        %v1110 = vshrl.u32 %v1109, 7
        %v1111 = vsub.s32 1, %v1110
        %v1112 = vrot.slane %v507, %v1111
        %v1113 = vlaneseq
        %v1114 = vshrl.u32 %v1113, 7
        %v1115 = vsub.s32 3, %v1114
        %v1116 = vrot.slane %v507, %v1115
        %v1117 = vlaneseq
        %v1118 = vshrl.u32 %v1117, 7
        %v1119 = vsub.s32 5, %v1118
        %v1120 = vrot.slane %v507, %v1119
        %v1121 = vlaneseq
        %v1122 = vshrl.u32 %v1121, 7
        %v1123 = vsub.s32 7, %v1122
        %v1124 = vrot.slane %v507, %v1123
        %v1129 = vlaneseq
        %v1130 = vshrl.u32 %v1129, 7
        %v1131 = vsub.s32 1, %v1130
        %v1132 = vrot.slane %v511, %v1131
        %v1133 = vlaneseq
        %v1134 = vshrl.u32 %v1133, 7
        %v1135 = vsub.s32 3, %v1134
        %v1136 = vrot.slane %v511, %v1135
        %v1137 = vlaneseq
        %v1138 = vshrl.u32 %v1137, 7
        %v1139 = vsub.s32 5, %v1138
        %v1140 = vrot.slane %v511, %v1139
        %v1141 = vlaneseq
        %v1142 = vshrl.u32 %v1141, 7
        %v1143 = vsub.s32 7, %v1142
        %v1144 = vrot.slane %v511, %v1143
        %v1149 = vlaneseq
        %v1150 = vshrl.u32 %v1149, 7
        %v1151 = vsub.s32 1, %v1150
        %v1152 = vrot.slane %v515, %v1151
        %v1153 = vlaneseq
        %v1154 = vshrl.u32 %v1153, 7
        %v1155 = vsub.s32 3, %v1154
        %v1156 = vrot.slane %v515, %v1155
        %v1157 = vlaneseq
        %v1158 = vshrl.u32 %v1157, 7
        %v1159 = vsub.s32 5, %v1158
        %v1160 = vrot.slane %v515, %v1159
        %v1161 = vlaneseq
        %v1162 = vshrl.u32 %v1161, 7
        %v1163 = vsub.s32 7, %v1162
        %v1164 = vrot.slane %v515, %v1163
        %v1169 = vlaneseq
        %v1170 = vshrl.u32 %v1169, 7
        %v1171 = vsub.s32 1, %v1170
        %v1172 = vrot.slane %v519, %v1171
        %v1173 = vlaneseq
        %v1174 = vshrl.u32 %v1173, 7
        %v1175 = vsub.s32 3, %v1174
        %v1176 = vrot.slane %v519, %v1175
        %v1177 = vlaneseq
        %v1178 = vshrl.u32 %v1177, 7
        %v1179 = vsub.s32 5, %v1178
        %v1180 = vrot.slane %v519, %v1179
        %v1181 = vlaneseq
        %v1182 = vshrl.u32 %v1181, 7
        %v1183 = vsub.s32 7, %v1182
        %v1184 = vrot.slane %v519, %v1183
        %v1189 = vlaneseq
        %v1190 = vshrl.u32 %v1189, 7
        %v1191 = vsub.s32 1, %v1190
        %v1192 = vrot.slane %v523, %v1191
        %v1193 = vlaneseq
        %v1194 = vshrl.u32 %v1193, 7
        %v1195 = vsub.s32 3, %v1194
        %v1196 = vrot.slane %v523, %v1195
        %v1197 = vlaneseq
        %v1198 = vshrl.u32 %v1197, 7
        %v1199 = vsub.s32 5, %v1198
        %v1200 = vrot.slane %v523, %v1199
        %v1201 = vlaneseq
        %v1202 = vshrl.u32 %v1201, 7
        %v1203 = vsub.s32 7, %v1202
        %v1204 = vrot.slane %v523, %v1203
        %v1209 = vlaneseq
        %v1210 = vshrl.u32 %v1209, 7
        %v1211 = vsub.s32 1, %v1210
        %v1212 = vrot.slane %v489, %v1211
        %v1213 = vlaneseq
        %v1214 = vshrl.u32 %v1213, 7
        %v1215 = vsub.s32 3, %v1214
        %v1216 = vrot.slane %v489, %v1215
        %v1217 = vlaneseq
        %v1218 = vshrl.u32 %v1217, 7
        %v1219 = vsub.s32 5, %v1218
        %v1220 = vrot.slane %v489, %v1219
        %v1221 = vlaneseq
        %v1222 = vshrl.u32 %v1221, 7
        %v1223 = vsub.s32 7, %v1222
        %v1224 = vrot.slane %v489, %v1223
        %v1229 = vlaneseq
        %v1230 = vshrl.u32 %v1229, 7
        %v1231 = vsub.s32 1, %v1230
        %v1232 = vrot.slane %v493, %v1231
        %v1233 = vlaneseq
        %v1234 = vshrl.u32 %v1233, 7
        %v1235 = vsub.s32 3, %v1234
        %v1236 = vrot.slane %v493, %v1235
        %v1237 = vlaneseq
        %v1238 = vshrl.u32 %v1237, 7
        %v1239 = vsub.s32 5, %v1238
        %v1240 = vrot.slane %v493, %v1239
        %v1241 = vlaneseq
        %v1242 = vshrl.u32 %v1241, 7
        %v1243 = vsub.s32 7, %v1242
        %v1244 = vrot.slane %v493, %v1243
        %v1249 = vsel %vm862, %v929, %v950
        %v1250 = vsel %vm862, %v933, %v954
        %v1251 = vsel %vm862, %v937, %v958
        %v1252 = vsel %vm862, %v941, %v962
        %v1253 = vsel %vm867, %v1249, %v971
        %v1254 = vsel %vm867, %v1250, %v975
        %v1255 = vsel %vm867, %v1251, %v979
        %v1256 = vsel %vm867, %v1252, %v983
        %v1257 = vsel %vm872, %v1253, %v992
        %v1258 = vsel %vm872, %v1254, %v996
        %v1259 = vsel %vm872, %v1255, %v1000
        %v1260 = vsel %vm872, %v1256, %v1004
        %v1261 = vsel %vm877, %v1257, %v1012
        %v1262 = vsel %vm877, %v1258, %v1016
        %v1263 = vsel %vm877, %v1259, %v1020
        %v1264 = vsel %vm877, %v1260, %v1024
        %v1265 = vsel %vm882, %v1261, %v1032
        %v1266 = vsel %vm882, %v1262, %v1036
        %v1267 = vsel %vm882, %v1263, %v1040
        %v1268 = vsel %vm882, %v1264, %v1044
        %v1269 = vsel %vm887, %v1265, %v1052
        %v1270 = vsel %vm887, %v1266, %v1056
        %v1271 = vsel %vm887, %v1267, %v1060
        %v1272 = vsel %vm887, %v1268, %v1064
        %v1273 = vsel %vm892, %v1269, %v1072
        %v1274 = vsel %vm892, %v1270, %v1076
        %v1275 = vsel %vm892, %v1271, %v1080
        %v1276 = vsel %vm892, %v1272, %v1084
        %v1277 = vsel %vm862, %v1092, %v1112
        %v1278 = vsel %vm862, %v1096, %v1116
        %v1279 = vsel %vm862, %v1100, %v1120
        %v1280 = vsel %vm862, %v1104, %v1124
        %v1281 = vsel %vm867, %v1277, %v1132
        %v1282 = vsel %vm867, %v1278, %v1136
        %v1283 = vsel %vm867, %v1279, %v1140
        %v1284 = vsel %vm867, %v1280, %v1144
        %v1285 = vsel %vm872, %v1281, %v1152
        %v1286 = vsel %vm872, %v1282, %v1156
        %v1287 = vsel %vm872, %v1283, %v1160
        %v1288 = vsel %vm872, %v1284, %v1164
        %v1289 = vsel %vm877, %v1285, %v1172
        %v1290 = vsel %vm877, %v1286, %v1176
        %v1291 = vsel %vm877, %v1287, %v1180
        %v1292 = vsel %vm877, %v1288, %v1184
        %v1293 = vsel %vm882, %v1289, %v1192
        %v1294 = vsel %vm882, %v1290, %v1196
        %v1295 = vsel %vm882, %v1291, %v1200
        %v1296 = vsel %vm882, %v1292, %v1204
        %v1297 = vsel %vm887, %v1293, %v1212
        %v1298 = vsel %vm887, %v1294, %v1216
        %v1299 = vsel %vm887, %v1295, %v1220
        %v1300 = vsel %vm887, %v1296, %v1224
        %v1301 = vsel %vm892, %v1297, %v1232
        %v1302 = vsel %vm892, %v1298, %v1236
        %v1303 = vsel %vm892, %v1299, %v1240
        %v1304 = vsel %vm892, %v1300, %v1244
        %v1305 = vlaneseq
        %v1306 = vshrl.u32 %v1305, 7
        %v1307 = vsub.s32 1, %v1306
        %v1308 = vrot.slane %v497, %v1307
        %v1309 = vlaneseq
        %v1310 = vshrl.u32 %v1309, 7
        %v1311 = vsub.s32 3, %v1310
        %v1312 = vrot.slane %v497, %v1311
        %v1313 = vlaneseq
        %v1314 = vshrl.u32 %v1313, 7
        %v1315 = vsub.s32 5, %v1314
        %v1316 = vrot.slane %v497, %v1315
        %v1317 = vlaneseq
        %v1318 = vshrl.u32 %v1317, 7
        %v1319 = vsub.s32 7, %v1318
        %v1320 = vrot.slane %v497, %v1319
        %v1325 = vlaneseq
        %v1326 = vshrl.u32 %v1325, 7
        %v1327 = vsub.s32 1, %v1326
        %v1328 = vrot.slane %v501, %v1327
        %v1329 = vlaneseq
        %v1330 = vshrl.u32 %v1329, 7
        %v1331 = vsub.s32 3, %v1330
        %v1332 = vrot.slane %v501, %v1331
        %v1333 = vlaneseq
        %v1334 = vshrl.u32 %v1333, 7
        %v1335 = vsub.s32 5, %v1334
        %v1336 = vrot.slane %v501, %v1335
        %v1337 = vlaneseq
        %v1338 = vshrl.u32 %v1337, 7
        %v1339 = vsub.s32 7, %v1338
        %v1340 = vrot.slane %v501, %v1339
        %v1345 = vlaneseq
        %v1346 = vshrl.u32 %v1345, 7
        %v1347 = vsub.s32 1, %v1346
        %v1348 = vrot.slane %v505, %v1347
        %v1349 = vlaneseq
        %v1350 = vshrl.u32 %v1349, 7
        %v1351 = vsub.s32 3, %v1350
        %v1352 = vrot.slane %v505, %v1351
        %v1353 = vlaneseq
        %v1354 = vshrl.u32 %v1353, 7
        %v1355 = vsub.s32 5, %v1354
        %v1356 = vrot.slane %v505, %v1355
        %v1357 = vlaneseq
        %v1358 = vshrl.u32 %v1357, 7
        %v1359 = vsub.s32 7, %v1358
        %v1360 = vrot.slane %v505, %v1359
        %v1365 = vlaneseq
        %v1366 = vshrl.u32 %v1365, 7
        %v1367 = vsub.s32 1, %v1366
        %v1368 = vrot.slane %v509, %v1367
        %v1369 = vlaneseq
        %v1370 = vshrl.u32 %v1369, 7
        %v1371 = vsub.s32 3, %v1370
        %v1372 = vrot.slane %v509, %v1371
        %v1373 = vlaneseq
        %v1374 = vshrl.u32 %v1373, 7
        %v1375 = vsub.s32 5, %v1374
        %v1376 = vrot.slane %v509, %v1375
        %v1377 = vlaneseq
        %v1378 = vshrl.u32 %v1377, 7
        %v1379 = vsub.s32 7, %v1378
        %v1380 = vrot.slane %v509, %v1379
        %v1385 = vlaneseq
        %v1386 = vshrl.u32 %v1385, 7
        %v1387 = vsub.s32 1, %v1386
        %v1388 = vrot.slane %v513, %v1387
        %v1389 = vlaneseq
        %v1390 = vshrl.u32 %v1389, 7
        %v1391 = vsub.s32 3, %v1390
        %v1392 = vrot.slane %v513, %v1391
        %v1393 = vlaneseq
        %v1394 = vshrl.u32 %v1393, 7
        %v1395 = vsub.s32 5, %v1394
        %v1396 = vrot.slane %v513, %v1395
        %v1397 = vlaneseq
        %v1398 = vshrl.u32 %v1397, 7
        %v1399 = vsub.s32 7, %v1398
        %v1400 = vrot.slane %v513, %v1399
        %v1405 = vlaneseq
        %v1406 = vshrl.u32 %v1405, 7
        %v1407 = vsub.s32 1, %v1406
        %v1408 = vrot.slane %v517, %v1407
        %v1409 = vlaneseq
        %v1410 = vshrl.u32 %v1409, 7
        %v1411 = vsub.s32 3, %v1410
        %v1412 = vrot.slane %v517, %v1411
        %v1413 = vlaneseq
        %v1414 = vshrl.u32 %v1413, 7
        %v1415 = vsub.s32 5, %v1414
        %v1416 = vrot.slane %v517, %v1415
        %v1417 = vlaneseq
        %v1418 = vshrl.u32 %v1417, 7
        %v1419 = vsub.s32 7, %v1418
        %v1420 = vrot.slane %v517, %v1419
        %v1425 = vlaneseq
        %v1426 = vshrl.u32 %v1425, 7
        %v1427 = vsub.s32 1, %v1426
        %v1428 = vrot.slane %v521, %v1427
        %v1429 = vlaneseq
        %v1430 = vshrl.u32 %v1429, 7
        %v1431 = vsub.s32 3, %v1430
        %v1432 = vrot.slane %v521, %v1431
        %v1433 = vlaneseq
        %v1434 = vshrl.u32 %v1433, 7
        %v1435 = vsub.s32 5, %v1434
        %v1436 = vrot.slane %v521, %v1435
        %v1437 = vlaneseq
        %v1438 = vshrl.u32 %v1437, 7
        %v1439 = vsub.s32 7, %v1438
        %v1440 = vrot.slane %v521, %v1439
        %v1445 = vlaneseq
        %v1446 = vshrl.u32 %v1445, 7
        %v1447 = vsub.s32 1, %v1446
        %v1448 = vrot.slane %v525, %v1447
        %v1449 = vlaneseq
        %v1450 = vshrl.u32 %v1449, 7
        %v1451 = vsub.s32 3, %v1450
        %v1452 = vrot.slane %v525, %v1451
        %v1453 = vlaneseq
        %v1454 = vshrl.u32 %v1453, 7
        %v1455 = vsub.s32 5, %v1454
        %v1456 = vrot.slane %v525, %v1455
        %v1457 = vlaneseq
        %v1458 = vshrl.u32 %v1457, 7
        %v1459 = vsub.s32 7, %v1458
        %v1460 = vrot.slane %v525, %v1459
        %v1465 = vsel %vm862, %v1308, %v1328
        %v1466 = vsel %vm862, %v1312, %v1332
        %v1467 = vsel %vm862, %v1316, %v1336
        %v1468 = vsel %vm862, %v1320, %v1340
        %v1469 = vsel %vm867, %v1465, %v1348
        %v1470 = vsel %vm867, %v1466, %v1352
        %v1471 = vsel %vm867, %v1467, %v1356
        %v1472 = vsel %vm867, %v1468, %v1360
        %v1473 = vsel %vm872, %v1469, %v1368
        %v1474 = vsel %vm872, %v1470, %v1372
        %v1475 = vsel %vm872, %v1471, %v1376
        %v1476 = vsel %vm872, %v1472, %v1380
        %v1477 = vsel %vm877, %v1473, %v1388
        %v1478 = vsel %vm877, %v1474, %v1392
        %v1479 = vsel %vm877, %v1475, %v1396
        %v1480 = vsel %vm877, %v1476, %v1400
        %v1481 = vsel %vm882, %v1477, %v1408
        %v1482 = vsel %vm882, %v1478, %v1412
        %v1483 = vsel %vm882, %v1479, %v1416
        %v1484 = vsel %vm882, %v1480, %v1420
        %v1485 = vsel %vm887, %v1481, %v1428
        %v1486 = vsel %vm887, %v1482, %v1432
        %v1487 = vsel %vm887, %v1483, %v1436
        %v1488 = vsel %vm887, %v1484, %v1440
        %v1489 = vsel %vm892, %v1485, %v1448
        %v1490 = vsel %vm892, %v1486, %v1452
        %v1491 = vsel %vm892, %v1487, %v1456
        %v1492 = vsel %vm892, %v1488, %v1460
        %v1493 = vpack.c.bf16 %v921, %v893
        %v1494 = vpack.c.bf16 %v922, %v894
        %v1495 = vpack.c.bf16 %v923, %v895
        %v1496 = vpack.c.bf16 %v924, %v896
        %v1497 = vpack.c.bf16 %v1301, %v1273
        %v1498 = vpack.c.bf16 %v1302, %v1274
        %v1499 = vpack.c.bf16 %v1303, %v1275
        %v1500 = vpack.c.bf16 %v1304, %v1276
        %v1501 = vpack.c.bf16 %v1489, %v1489
        %v1502 = vpack.c.bf16 %v1490, %v1490
        %v1503 = vpack.c.bf16 %v1491, %v1491
        %v1504 = vpack.c.bf16 %v1492, %v1492
        %v1505 = vld [vmem:[%s1] sm:$0xf]
        %v1506 = vld [vmem:[%s1 + $0x4] sm:$0xf]
        %v1507 = vld [vmem:[%s1 + $0x8] sm:$0xf]
        %v1508 = vld [vmem:[%s1 + $0xc] sm:$0xf]
        %v1509 = vld [vmem:[%s1 + $0x10] sm:$0xf]
        %v1510 = vld [vmem:[%s1 + $0x14] sm:$0xf]
        %v1511 = vld [vmem:[%s1 + $0x18] sm:$0xf]
        %v1512 = vld [vmem:[%s1 + $0x1c] sm:$0xf]
        %v1521 = vunpack.c.l.b16 %v1505
        %v1522 = vunpack.c.l.b16 %v1506
        %v1523 = vunpack.c.l.b16 %v1507
        %v1524 = vunpack.c.l.b16 %v1508
        %v1525 = vunpack.c.l.b16 %v1509
        %v1526 = vunpack.c.l.b16 %v1510
        %v1527 = vunpack.c.l.b16 %v1511
        %v1528 = vunpack.c.l.b16 %v1512
        %v1529 = vpack.c.b16 %v1522, %v1521
        %v1530 = vpack.c.b16 %v1524, %v1523
        %v1531 = vpack.c.b16 %v1526, %v1525
        %v1532 = vpack.c.b16 %v1528, %v1527
        %vm1533 = vcmask 326656
        %v1535 = vsel %vm1533, %v1529, 0
        %v1538 = vsel %vm1533, %v1530, 0
        %v1541 = vsel %vm1533, %v1531, 0
        %v1544 = vsel %vm1533, %v1532, 0
        %v1547 = vsel %vm877, %v1501, 0
        %v1550 = vsel %vm877, %v1502, 0
        %v1553 = vsel %vm877, %v1503, 0
        %v1556 = vsel %vm877, %v1504, 0
        %1558 = vmatprep.subr.bf16.mxu0 %v1494
        %1559 = vmatpush1.bf16.msra.mxu0 %v1493
        %1560 = vmatprep.subr.bf16.mxu0 %v1498
        %1561 = vmatpush1.bf16.msra.mxu0 %v1497
        %1562 = vmatprep.subr.bf16.mxu0 %v1550
        %1563 = vmatpush1.bf16.msra.mxu0 %v1547
        %1564 = vmatprep.subr.bf16.mxu0 0
        %1565 = vmatpush1.bf16.msra.mxu0 0
        %1566 = vmatprep.subr.bf16.mxu0 0
        %1567 = vmatpush1.bf16.msra.mxu0 0
        %1568 = vmatprep.subr.bf16.mxu0 0
        %1569 = vmatpush1.bf16.msra.mxu0 0
        %1570 = vmatprep.subr.bf16.mxu0 0
        %1571 = vmatpush1.bf16.msra.mxu0 0
        %1572 = vmatprep.subr.bf16.mxu0 0
        %1573 = vmatpush1.bf16.msra.mxu0 0
        %1574 = vmatprep.subr.bf16.mxu0 0
        %1575 = vmatpush1.bf16.msra.mxu0 0
        %1576 = vmatprep.subr.bf16.mxu0 0
        %1577 = vmatpush1.bf16.msra.mxu0 0
        %1578 = vmatprep.subr.bf16.mxu0 0
        %1579 = vmatpush1.bf16.msra.mxu0 0
        %1580 = vmatprep.subr.bf16.mxu0 0
        %1581 = vmatpush1.bf16.msra.mxu0 0
        %1582 = vmatprep.subr.bf16.mxu0 0
        %1583 = vmatpush1.bf16.msra.mxu0 0
        %1584 = vmatprep.subr.bf16.mxu0 0
        %1585 = vmatpush1.bf16.msra.mxu0 0
        %1586 = vmatprep.subr.bf16.mxu0 0
        %1587 = vmatpush1.bf16.msra.mxu0 0
        %1588 = vmatprep.subr.bf16.mxu0 0
        %1589 = vmatpush1.bf16.msra.mxu0 0
        %1590 = vmatprep.mubr.bf16.mxu0 0
        %1591 = vmatmul.mubr.bf16.gmra.mrb[0].mxu0 %v1535
        %v1592 = vpop.f32.mrb[0].mxu0
        %v1593 = vadd.f32 0.0, %v1592
        %v1594 = vpop.f32.mrb[0].mxu0
        %v1595 = vadd.f32 0.0, %v1594
        %v1596 = vpop.f32.mrb[0].mxu0
        %v1597 = vadd.f32 0.0, %v1596
        %v1598 = vpop.f32.mrb[0].mxu0
        %v1599 = vadd.f32 0.0, %v1598
        %1600 = vmatprep.mubr.bf16.mxu0 0
        %1601 = vmatmul.mubr.bf16.gmra.mrb[0].mxu0 %v1538
        %v1602 = vpop.f32.mrb[0].mxu0
        %v1603 = vadd.f32 0.0, %v1602
        %v1604 = vpop.f32.mrb[0].mxu0
        %v1605 = vadd.f32 0.0, %v1604
        %v1606 = vpop.f32.mrb[0].mxu0
        %v1607 = vadd.f32 0.0, %v1606
        %v1608 = vpop.f32.mrb[0].mxu0
        %v1609 = vadd.f32 0.0, %v1608
        %1610 = vmatprep.mubr.bf16.mxu0 0
        %1611 = vmatmul.mubr.bf16.gmra.mrb[0].mxu0 %v1541
        %v1612 = vpop.f32.mrb[0].mxu0
        %v1613 = vadd.f32 0.0, %v1612
        %v1614 = vpop.f32.mrb[0].mxu0
        %v1615 = vadd.f32 0.0, %v1614
        %v1616 = vpop.f32.mrb[0].mxu0
        %v1617 = vadd.f32 0.0, %v1616
        %v1618 = vpop.f32.mrb[0].mxu0
        %v1619 = vadd.f32 0.0, %v1618
        %1620 = vmatprep.mubr.bf16.mxu0 0
        %1621 = vmatmul.mubr.bf16.gmra.mrb[0].mxu0 %v1544
        %v1622 = vpop.f32.mrb[0].mxu0
        %v1623 = vadd.f32 0.0, %v1622
        %v1624 = vpop.f32.mrb[0].mxu0
        %v1625 = vadd.f32 0.0, %v1624
        %v1626 = vpop.f32.mrb[0].mxu0
        %v1627 = vadd.f32 0.0, %v1626
        %v1628 = vpop.f32.mrb[0].mxu0
        %v1629 = vadd.f32 0.0, %v1628
        %1630 = vdwg.mxu0
        %1631 = vmatprep.subr.bf16.mxu0 %v1496
        %1632 = vmatpush1.bf16.msra.mxu0 %v1495
        %1633 = vmatprep.subr.bf16.mxu0 %v1500
        %1634 = vmatpush1.bf16.msra.mxu0 %v1499
        %1635 = vmatprep.subr.bf16.mxu0 %v1556
        %1636 = vmatpush1.bf16.msra.mxu0 %v1553
        %1637 = vmatprep.subr.bf16.mxu0 0
        %1638 = vmatpush1.bf16.msra.mxu0 0
        %1639 = vmatprep.subr.bf16.mxu0 0
        %1640 = vmatpush1.bf16.msra.mxu0 0
        %1641 = vmatprep.subr.bf16.mxu0 0
        %1642 = vmatpush1.bf16.msra.mxu0 0
        %1643 = vmatprep.subr.bf16.mxu0 0
        %1644 = vmatpush1.bf16.msra.mxu0 0
        %1645 = vmatprep.subr.bf16.mxu0 0
        %1646 = vmatpush1.bf16.msra.mxu0 0
        %1647 = vmatprep.subr.bf16.mxu0 0
        %1648 = vmatpush1.bf16.msra.mxu0 0
        %1649 = vmatprep.subr.bf16.mxu0 0
        %1650 = vmatpush1.bf16.msra.mxu0 0
        %1651 = vmatprep.subr.bf16.mxu0 0
        %1652 = vmatpush1.bf16.msra.mxu0 0
        %1653 = vmatprep.subr.bf16.mxu0 0
        %1654 = vmatpush1.bf16.msra.mxu0 0
        %1655 = vmatprep.subr.bf16.mxu0 0
        %1656 = vmatpush1.bf16.msra.mxu0 0
        %1657 = vmatprep.subr.bf16.mxu0 0
        %1658 = vmatpush1.bf16.msra.mxu0 0
        %1659 = vmatprep.subr.bf16.mxu0 0
        %1660 = vmatpush1.bf16.msra.mxu0 0
        %1661 = vmatprep.subr.bf16.mxu0 0
        %1662 = vmatpush1.bf16.msra.mxu0 0
        %1663 = vmatprep.mubr.bf16.mxu0 0
        %1664 = vmatmul.mubr.bf16.gmra.mrb[0].mxu0 %v1535
        %v1665 = vpop.f32.mrb[0].mxu0
        %v1666 = vadd.f32 0.0, %v1665
        %v1667 = vpop.f32.mrb[0].mxu0
        %v1668 = vadd.f32 0.0, %v1667
        %v1669 = vpop.f32.mrb[0].mxu0
        %v1670 = vadd.f32 0.0, %v1669
        %v1671 = vpop.f32.mrb[0].mxu0
        %v1672 = vadd.f32 0.0, %v1671
        %1673 = vmatprep.mubr.bf16.mxu0 0
        %1674 = vmatmul.mubr.bf16.gmra.mrb[0].mxu0 %v1538
        %v1675 = vpop.f32.mrb[0].mxu0
        %v1676 = vadd.f32 0.0, %v1675
        %v1677 = vpop.f32.mrb[0].mxu0
        %v1678 = vadd.f32 0.0, %v1677
        %v1679 = vpop.f32.mrb[0].mxu0
        %v1680 = vadd.f32 0.0, %v1679
        %v1681 = vpop.f32.mrb[0].mxu0
        %v1682 = vadd.f32 0.0, %v1681
        %1683 = vmatprep.mubr.bf16.mxu0 0
        %1684 = vmatmul.mubr.bf16.gmra.mrb[0].mxu0 %v1541
        %v1685 = vpop.f32.mrb[0].mxu0
        %v1686 = vadd.f32 0.0, %v1685
        %v1687 = vpop.f32.mrb[0].mxu0
        %v1688 = vadd.f32 0.0, %v1687
        %v1689 = vpop.f32.mrb[0].mxu0
        %v1690 = vadd.f32 0.0, %v1689
        %v1691 = vpop.f32.mrb[0].mxu0
        %v1692 = vadd.f32 0.0, %v1691
        %1693 = vmatprep.mubr.bf16.mxu0 0
        %1694 = vmatmul.mubr.bf16.gmra.mrb[0].mxu0 %v1544
        %v1695 = vpop.f32.mrb[0].mxu0
        %v1696 = vadd.f32 0.0, %v1695
        %v1697 = vpop.f32.mrb[0].mxu0
        %v1698 = vadd.f32 0.0, %v1697
        %v1699 = vpop.f32.mrb[0].mxu0
        %v1700 = vadd.f32 0.0, %v1699
        %v1701 = vpop.f32.mrb[0].mxu0
        %v1702 = vadd.f32 0.0, %v1701
        %1703 = vdwg.mxu0
        %v1704 = vpack.c.bf16 %v1597, %v1593
        %v1705 = vpack.c.bf16 %v1599, %v1595
        %v1706 = vpack.c.bf16 %v1670, %v1666
        %v1707 = vpack.c.bf16 %v1672, %v1668
        %v1708 = vpack.c.bf16 %v1607, %v1603
        %v1709 = vpack.c.bf16 %v1609, %v1605
        %v1710 = vpack.c.bf16 %v1680, %v1676
        %v1711 = vpack.c.bf16 %v1682, %v1678
        %v1712 = vpack.c.bf16 %v1617, %v1613
        %v1713 = vpack.c.bf16 %v1619, %v1615
        %v1714 = vpack.c.bf16 %v1690, %v1686
        %v1715 = vpack.c.bf16 %v1692, %v1688
        %v1716 = vpack.c.bf16 %v1627, %v1623
        %v1717 = vpack.c.bf16 %v1629, %v1625
        %v1718 = vpack.c.bf16 %v1700, %v1696
        %v1719 = vpack.c.bf16 %v1702, %v1698
        %v1720 = vld [vmem:[%s2] sm:$0xf]
        %v1721 = vld [vmem:[%s2 + $0x4] sm:$0xf]
        %v1722 = vld [vmem:[%s2 + $0x8] sm:$0xf]
        %v1723 = vld [vmem:[%s2 + $0xc] sm:$0xf]
        %v1724 = vld [vmem:[%s2 + $0x10] sm:$0xf]
        %v1725 = vld [vmem:[%s2 + $0x14] sm:$0xf]
        %v1726 = vld [vmem:[%s2 + $0x18] sm:$0xf]
        %v1727 = vld [vmem:[%s2 + $0x1c] sm:$0xf]
        %1729 = vset.pattern.permute.xlu0 0
        %1730 = vperm.xlu0 %1729, %v1720
        %v1731 = vpop.permute.xlu0 %1730
        %v1734 = vunpack.c.l.s4 839922192
        %v1735 = vunpack.c.0.s8 %v1734
        %v1736 = vlaneseq
        %v1737 = vshrl.u32 %v1736, 7
        %v1738 = vsub.s32 %v1735, %v1737
        %v1739 = vrot.slane %v1731, %v1738
        %1741 = vset.pattern.permute.xlu0 0
        %1742 = vperm.xlu0 %1741, %v1721
        %v1743 = vpop.permute.xlu0 %1742
        %v1746 = vunpack.c.l.s4 839922192
        %v1747 = vunpack.c.0.s8 %v1746
        %v1748 = vlaneseq
        %v1749 = vshrl.u32 %v1748, 7
        %v1750 = vsub.s32 %v1747, %v1749
        %v1751 = vrot.slane %v1743, %v1750
        %1753 = vset.pattern.permute.xlu0 0
        %1754 = vperm.xlu0 %1753, %v1722
        %v1755 = vpop.permute.xlu0 %1754
        %v1758 = vunpack.c.l.s4 839922192
        %v1759 = vunpack.c.0.s8 %v1758
        %v1760 = vlaneseq
        %v1761 = vshrl.u32 %v1760, 7
        %v1762 = vsub.s32 %v1759, %v1761
        %v1763 = vrot.slane %v1755, %v1762
        %1765 = vset.pattern.permute.xlu0 0
        %1766 = vperm.xlu0 %1765, %v1723
        %v1767 = vpop.permute.xlu0 %1766
        %v1770 = vunpack.c.l.s4 839922192
        %v1771 = vunpack.c.0.s8 %v1770
        %v1772 = vlaneseq
        %v1773 = vshrl.u32 %v1772, 7
        %v1774 = vsub.s32 %v1771, %v1773
        %v1775 = vrot.slane %v1767, %v1774
        %1777 = vset.pattern.permute.xlu0 0
        %1778 = vperm.xlu0 %1777, %v1724
        %v1779 = vpop.permute.xlu0 %1778
        %v1782 = vunpack.c.l.s4 839922192
        %v1783 = vunpack.c.0.s8 %v1782
        %v1784 = vlaneseq
        %v1785 = vshrl.u32 %v1784, 7
        %v1786 = vsub.s32 %v1783, %v1785
        %v1787 = vrot.slane %v1779, %v1786
        %1789 = vset.pattern.permute.xlu0 0
        %1790 = vperm.xlu0 %1789, %v1725
        %v1791 = vpop.permute.xlu0 %1790
        %v1794 = vunpack.c.l.s4 839922192
        %v1795 = vunpack.c.0.s8 %v1794
        %v1796 = vlaneseq
        %v1797 = vshrl.u32 %v1796, 7
        %v1798 = vsub.s32 %v1795, %v1797
        %v1799 = vrot.slane %v1791, %v1798
        %1801 = vset.pattern.permute.xlu0 0
        %1802 = vperm.xlu0 %1801, %v1726
        %v1803 = vpop.permute.xlu0 %1802
        %v1806 = vunpack.c.l.s4 839922192
        %v1807 = vunpack.c.0.s8 %v1806
        %v1808 = vlaneseq
        %v1809 = vshrl.u32 %v1808, 7
        %v1810 = vsub.s32 %v1807, %v1809
        %v1811 = vrot.slane %v1803, %v1810
        %1813 = vset.pattern.permute.xlu0 0
        %1814 = vperm.xlu0 %1813, %v1727
        %v1815 = vpop.permute.xlu0 %1814
        %v1818 = vunpack.c.l.s4 839922192
        %v1819 = vunpack.c.0.s8 %v1818
        %v1820 = vlaneseq
        %v1821 = vshrl.u32 %v1820, 7
        %v1822 = vsub.s32 %v1819, %v1821
        %v1823 = vrot.slane %v1815, %v1822
        %v1832 = vunpack.c.l.b16 %v1739
        %v1833 = vunpack.c.l.b16 %v1751
        %v1834 = vunpack.c.l.b16 %v1763
        %v1835 = vunpack.c.l.b16 %v1775
        %v1836 = vunpack.c.l.b16 %v1787
        %v1837 = vunpack.c.l.b16 %v1799
        %v1838 = vunpack.c.l.b16 %v1811
        %v1839 = vunpack.c.l.b16 %v1823
        %v1840 = vpack.c.b16 %v1833, %v1832
        %v1841 = vpack.c.b16 %v1835, %v1834
        %v1842 = vpack.c.b16 %v1837, %v1836
        %v1843 = vpack.c.b16 %v1839, %v1838
        %v1848 = vadd.bf16 %v1704, %v1840
        %v1849 = vadd.bf16 %v1705, %v1840
        %v1850 = vadd.bf16 %v1706, %v1840
        %v1851 = vadd.bf16 %v1707, %v1840
        %v1852 = vadd.bf16 %v1708, %v1841
        %v1853 = vadd.bf16 %v1709, %v1841
        %v1854 = vadd.bf16 %v1710, %v1841
        %v1855 = vadd.bf16 %v1711, %v1841
        %v1856 = vadd.bf16 %v1712, %v1842
        %v1857 = vadd.bf16 %v1713, %v1842
        %v1858 = vadd.bf16 %v1714, %v1842
        %v1859 = vadd.bf16 %v1715, %v1842
        %v1860 = vadd.bf16 %v1716, %v1843
        %v1861 = vadd.bf16 %v1717, %v1843
        %v1862 = vadd.bf16 %v1718, %v1843
        %v1863 = vadd.bf16 %v1719, %v1843
        %v1864 = vmax.bf16 %v1848, 0
        %v1865 = vmax.bf16 %v1849, 0
        %v1866 = vmax.bf16 %v1850, 0
        %v1867 = vmax.bf16 %v1851, 0
        %v1868 = vmax.bf16 %v1852, 0
        %v1869 = vmax.bf16 %v1853, 0
        %v1870 = vmax.bf16 %v1854, 0
        %v1871 = vmax.bf16 %v1855, 0
        %v1872 = vmax.bf16 %v1856, 0
        %v1873 = vmax.bf16 %v1857, 0
        %v1874 = vmax.bf16 %v1858, 0
        %v1875 = vmax.bf16 %v1859, 0
        %v1876 = vmax.bf16 %v1860, 0
        %v1877 = vmax.bf16 %v1861, 0
        %v1878 = vmax.bf16 %v1862, 0
        %v1879 = vmax.bf16 %v1863, 0
        %v1880 = vld [vmem:[%s3] sm:$0xf]
        %v1881 = vld [vmem:[%s3 + $0x4] sm:$0xf]
        %v1882 = vld [vmem:[%s3 + $0x8] sm:$0xf]
        %v1883 = vld [vmem:[%s3 + $0xc] sm:$0xf]
        %v1884 = vld [vmem:[%s3 + $0x10] sm:$0xf]
        %v1885 = vld [vmem:[%s3 + $0x14] sm:$0xf]
        %v1886 = vld [vmem:[%s3 + $0x18] sm:$0xf]
        %v1887 = vld [vmem:[%s3 + $0x1c] sm:$0xf]
        %v1896 = vunpack.c.l.b16 %v1880
        %v1897 = vunpack.c.l.b16 %v1881
        %v1898 = vunpack.c.l.b16 %v1882
        %v1899 = vunpack.c.l.b16 %v1883
        %v1900 = vunpack.c.l.b16 %v1884
        %v1901 = vunpack.c.l.b16 %v1885
        %v1902 = vunpack.c.l.b16 %v1886
        %v1903 = vunpack.c.l.b16 %v1887
        %v1904 = vpack.c.b16 %v1897, %v1896
        %v1905 = vpack.c.b16 %v1899, %v1898
        %v1906 = vpack.c.b16 %v1901, %v1900
        %v1907 = vpack.c.b16 %v1903, %v1902
        %vm1908 = vcmask 523264
        %v1910 = vsel %vm1908, %v1904, 0
        %v1913 = vsel %vm1908, %v1905, 0
        %v1916 = vsel %vm1908, %v1906, 0
        %v1919 = vsel %vm1908, %v1907, 0
        %1921 = vmatprep.subr.bf16.mxu0 %v1865
        %1922 = vmatpush1.bf16.msra.mxu0 %v1864
        %1923 = vmatprep.subr.bf16.mxu0 %v1869
        %1924 = vmatpush1.bf16.msra.mxu0 %v1868
        %1925 = vmatprep.subr.bf16.mxu0 %v1873
        %1926 = vmatpush1.bf16.msra.mxu0 %v1872
        %1927 = vmatprep.subr.bf16.mxu0 %v1877
        %1928 = vmatpush1.bf16.msra.mxu0 %v1876
        %1929 = vmatprep.subr.bf16.mxu0 0
        %1930 = vmatpush1.bf16.msra.mxu0 0
        %1931 = vmatprep.subr.bf16.mxu0 0
        %1932 = vmatpush1.bf16.msra.mxu0 0
        %1933 = vmatprep.subr.bf16.mxu0 0
        %1934 = vmatpush1.bf16.msra.mxu0 0
        %1935 = vmatprep.subr.bf16.mxu0 0
        %1936 = vmatpush1.bf16.msra.mxu0 0
        %1937 = vmatprep.subr.bf16.mxu0 0
        %1938 = vmatpush1.bf16.msra.mxu0 0
        %1939 = vmatprep.subr.bf16.mxu0 0
        %1940 = vmatpush1.bf16.msra.mxu0 0
        %1941 = vmatprep.subr.bf16.mxu0 0
        %1942 = vmatpush1.bf16.msra.mxu0 0
        %1943 = vmatprep.subr.bf16.mxu0 0
        %1944 = vmatpush1.bf16.msra.mxu0 0
        %1945 = vmatprep.subr.bf16.mxu0 0
        %1946 = vmatpush1.bf16.msra.mxu0 0
        %1947 = vmatprep.subr.bf16.mxu0 0
        %1948 = vmatpush1.bf16.msra.mxu0 0
        %1949 = vmatprep.subr.bf16.mxu0 0
        %1950 = vmatpush1.bf16.msra.mxu0 0
        %1951 = vmatprep.subr.bf16.mxu0 0
        %1952 = vmatpush1.bf16.msra.mxu0 0
        %1953 = vmatprep.mubr.bf16.mxu0 0
        %1954 = vmatmul.mubr.bf16.gmra.mrb[0].mxu0 %v1910
        %v1955 = vpop.f32.mrb[0].mxu0
        %v1956 = vadd.f32 0.0, %v1955
        %v1957 = vpop.f32.mrb[0].mxu0
        %v1958 = vadd.f32 0.0, %v1957
        %v1959 = vpop.f32.mrb[0].mxu0
        %v1960 = vadd.f32 0.0, %v1959
        %v1961 = vpop.f32.mrb[0].mxu0
        %v1962 = vadd.f32 0.0, %v1961
        %1963 = vmatprep.mubr.bf16.mxu0 0
        %1964 = vmatmul.mubr.bf16.gmra.mrb[0].mxu0 %v1913
        %v1965 = vpop.f32.mrb[0].mxu0
        %v1966 = vadd.f32 0.0, %v1965
        %v1967 = vpop.f32.mrb[0].mxu0
        %v1968 = vadd.f32 0.0, %v1967
        %v1969 = vpop.f32.mrb[0].mxu0
        %v1970 = vadd.f32 0.0, %v1969
        %v1971 = vpop.f32.mrb[0].mxu0
        %v1972 = vadd.f32 0.0, %v1971
        %1973 = vmatprep.mubr.bf16.mxu0 0
        %1974 = vmatmul.mubr.bf16.gmra.mrb[0].mxu0 %v1916
        %v1975 = vpop.f32.mrb[0].mxu0
        %v1976 = vadd.f32 0.0, %v1975
        %v1977 = vpop.f32.mrb[0].mxu0
        %v1978 = vadd.f32 0.0, %v1977
        %v1979 = vpop.f32.mrb[0].mxu0
        %v1980 = vadd.f32 0.0, %v1979
        %v1981 = vpop.f32.mrb[0].mxu0
        %v1982 = vadd.f32 0.0, %v1981
        %1983 = vmatprep.mubr.bf16.mxu0 0
        %1984 = vmatmul.mubr.bf16.gmra.mrb[0].mxu0 %v1919
        %v1985 = vpop.f32.mrb[0].mxu0
        %v1986 = vadd.f32 0.0, %v1985
        %v1987 = vpop.f32.mrb[0].mxu0
        %v1988 = vadd.f32 0.0, %v1987
        %v1989 = vpop.f32.mrb[0].mxu0
        %v1990 = vadd.f32 0.0, %v1989
        %v1991 = vpop.f32.mrb[0].mxu0
        %v1992 = vadd.f32 0.0, %v1991
        %1993 = vdwg.mxu0
        %1994 = vmatprep.subr.bf16.mxu0 %v1867
        %1995 = vmatpush1.bf16.msra.mxu0 %v1866
        %1996 = vmatprep.subr.bf16.mxu0 %v1871
        %1997 = vmatpush1.bf16.msra.mxu0 %v1870
        %1998 = vmatprep.subr.bf16.mxu0 %v1875
        %1999 = vmatpush1.bf16.msra.mxu0 %v1874
        %2000 = vmatprep.subr.bf16.mxu0 %v1879
        %2001 = vmatpush1.bf16.msra.mxu0 %v1878
        %2002 = vmatprep.subr.bf16.mxu0 0
        %2003 = vmatpush1.bf16.msra.mxu0 0
        %2004 = vmatprep.subr.bf16.mxu0 0
        %2005 = vmatpush1.bf16.msra.mxu0 0
        %2006 = vmatprep.subr.bf16.mxu0 0
        %2007 = vmatpush1.bf16.msra.mxu0 0
        %2008 = vmatprep.subr.bf16.mxu0 0
        %2009 = vmatpush1.bf16.msra.mxu0 0
        %2010 = vmatprep.subr.bf16.mxu0 0
        %2011 = vmatpush1.bf16.msra.mxu0 0
        %2012 = vmatprep.subr.bf16.mxu0 0
        %2013 = vmatpush1.bf16.msra.mxu0 0
        %2014 = vmatprep.subr.bf16.mxu0 0
        %2015 = vmatpush1.bf16.msra.mxu0 0
        %2016 = vmatprep.subr.bf16.mxu0 0
        %2017 = vmatpush1.bf16.msra.mxu0 0
        %2018 = vmatprep.subr.bf16.mxu0 0
        %2019 = vmatpush1.bf16.msra.mxu0 0
        %2020 = vmatprep.subr.bf16.mxu0 0
        %2021 = vmatpush1.bf16.msra.mxu0 0
        %2022 = vmatprep.subr.bf16.mxu0 0
        %2023 = vmatpush1.bf16.msra.mxu0 0
        %2024 = vmatprep.subr.bf16.mxu0 0
        %2025 = vmatpush1.bf16.msra.mxu0 0
        %2026 = vmatprep.mubr.bf16.mxu0 0
        %2027 = vmatmul.mubr.bf16.gmra.mrb[0].mxu0 %v1910
        %v2028 = vpop.f32.mrb[0].mxu0
        %v2029 = vadd.f32 0.0, %v2028
        %v2030 = vpop.f32.mrb[0].mxu0
        %v2031 = vadd.f32 0.0, %v2030
        %v2032 = vpop.f32.mrb[0].mxu0
        %v2033 = vadd.f32 0.0, %v2032
        %v2034 = vpop.f32.mrb[0].mxu0
        %v2035 = vadd.f32 0.0, %v2034
        %2036 = vmatprep.mubr.bf16.mxu0 0
        %2037 = vmatmul.mubr.bf16.gmra.mrb[0].mxu0 %v1913
        %v2038 = vpop.f32.mrb[0].mxu0
        %v2039 = vadd.f32 0.0, %v2038
        %v2040 = vpop.f32.mrb[0].mxu0
        %v2041 = vadd.f32 0.0, %v2040
        %v2042 = vpop.f32.mrb[0].mxu0
        %v2043 = vadd.f32 0.0, %v2042
        %v2044 = vpop.f32.mrb[0].mxu0
        %v2045 = vadd.f32 0.0, %v2044
        %2046 = vmatprep.mubr.bf16.mxu0 0
        %2047 = vmatmul.mubr.bf16.gmra.mrb[0].mxu0 %v1916
        %v2048 = vpop.f32.mrb[0].mxu0
        %v2049 = vadd.f32 0.0, %v2048
        %v2050 = vpop.f32.mrb[0].mxu0
        %v2051 = vadd.f32 0.0, %v2050
        %v2052 = vpop.f32.mrb[0].mxu0
        %v2053 = vadd.f32 0.0, %v2052
        %v2054 = vpop.f32.mrb[0].mxu0
        %v2055 = vadd.f32 0.0, %v2054
        %2056 = vmatprep.mubr.bf16.mxu0 0
        %2057 = vmatmul.mubr.bf16.gmra.mrb[0].mxu0 %v1919
        %v2058 = vpop.f32.mrb[0].mxu0
        %v2059 = vadd.f32 0.0, %v2058
        %v2060 = vpop.f32.mrb[0].mxu0
        %v2061 = vadd.f32 0.0, %v2060
        %v2062 = vpop.f32.mrb[0].mxu0
        %v2063 = vadd.f32 0.0, %v2062
        %v2064 = vpop.f32.mrb[0].mxu0
        %v2065 = vadd.f32 0.0, %v2064
        %2066 = vdwg.mxu0
        %v2067 = vpack.c.bf16 %v1960, %v1956
        %v2068 = vpack.c.bf16 %v1962, %v1958
        %v2069 = vpack.c.bf16 %v2033, %v2029
        %v2070 = vpack.c.bf16 %v2035, %v2031
        %v2071 = vpack.c.bf16 %v1970, %v1966
        %v2072 = vpack.c.bf16 %v1972, %v1968
        %v2073 = vpack.c.bf16 %v2043, %v2039
        %v2074 = vpack.c.bf16 %v2045, %v2041
        %v2075 = vpack.c.bf16 %v1980, %v1976
        %v2076 = vpack.c.bf16 %v1982, %v1978
        %v2077 = vpack.c.bf16 %v2053, %v2049
        %v2078 = vpack.c.bf16 %v2055, %v2051
        %v2079 = vpack.c.bf16 %v1990, %v1986
        %v2080 = vpack.c.bf16 %v1992, %v1988
        %v2081 = vpack.c.bf16 %v2063, %v2059
        %v2082 = vpack.c.bf16 %v2065, %v2061
        %v2083 = vld [vmem:[%s4] sm:$0xf]
        %v2084 = vld [vmem:[%s4 + $0x4] sm:$0xf]
        %v2085 = vld [vmem:[%s4 + $0x8] sm:$0xf]
        %v2086 = vld [vmem:[%s4 + $0xc] sm:$0xf]
        %v2087 = vld [vmem:[%s4 + $0x10] sm:$0xf]
        %v2088 = vld [vmem:[%s4 + $0x14] sm:$0xf]
        %v2089 = vld [vmem:[%s4 + $0x18] sm:$0xf]
        %v2090 = vld [vmem:[%s4 + $0x1c] sm:$0xf]
        %2092 = vset.pattern.permute.xlu0 0
        %2093 = vperm.xlu0 %2092, %v2083
        %v2094 = vpop.permute.xlu0 %2093
        %v2097 = vunpack.c.l.s4 839922192
        %v2098 = vunpack.c.0.s8 %v2097
        %v2099 = vlaneseq
        %v2100 = vshrl.u32 %v2099, 7
        %v2101 = vsub.s32 %v2098, %v2100
        %v2102 = vrot.slane %v2094, %v2101
        %2104 = vset.pattern.permute.xlu0 0
        %2105 = vperm.xlu0 %2104, %v2084
        %v2106 = vpop.permute.xlu0 %2105
        %v2109 = vunpack.c.l.s4 839922192
        %v2110 = vunpack.c.0.s8 %v2109
        %v2111 = vlaneseq
        %v2112 = vshrl.u32 %v2111, 7
        %v2113 = vsub.s32 %v2110, %v2112
        %v2114 = vrot.slane %v2106, %v2113
        %2116 = vset.pattern.permute.xlu0 0
        %2117 = vperm.xlu0 %2116, %v2085
        %v2118 = vpop.permute.xlu0 %2117
        %v2121 = vunpack.c.l.s4 839922192
        %v2122 = vunpack.c.0.s8 %v2121
        %v2123 = vlaneseq
        %v2124 = vshrl.u32 %v2123, 7
        %v2125 = vsub.s32 %v2122, %v2124
        %v2126 = vrot.slane %v2118, %v2125
        %2128 = vset.pattern.permute.xlu0 0
        %2129 = vperm.xlu0 %2128, %v2086
        %v2130 = vpop.permute.xlu0 %2129
        %v2133 = vunpack.c.l.s4 839922192
        %v2134 = vunpack.c.0.s8 %v2133
        %v2135 = vlaneseq
        %v2136 = vshrl.u32 %v2135, 7
        %v2137 = vsub.s32 %v2134, %v2136
        %v2138 = vrot.slane %v2130, %v2137
        %2140 = vset.pattern.permute.xlu0 0
        %2141 = vperm.xlu0 %2140, %v2087
        %v2142 = vpop.permute.xlu0 %2141
        %v2145 = vunpack.c.l.s4 839922192
        %v2146 = vunpack.c.0.s8 %v2145
        %v2147 = vlaneseq
        %v2148 = vshrl.u32 %v2147, 7
        %v2149 = vsub.s32 %v2146, %v2148
        %v2150 = vrot.slane %v2142, %v2149
        %2152 = vset.pattern.permute.xlu0 0
        %2153 = vperm.xlu0 %2152, %v2088
        %v2154 = vpop.permute.xlu0 %2153
        %v2157 = vunpack.c.l.s4 839922192
        %v2158 = vunpack.c.0.s8 %v2157
        %v2159 = vlaneseq
        %v2160 = vshrl.u32 %v2159, 7
        %v2161 = vsub.s32 %v2158, %v2160
        %v2162 = vrot.slane %v2154, %v2161
        %2164 = vset.pattern.permute.xlu0 0
        %2165 = vperm.xlu0 %2164, %v2089
        %v2166 = vpop.permute.xlu0 %2165
        %v2169 = vunpack.c.l.s4 839922192
        %v2170 = vunpack.c.0.s8 %v2169
        %v2171 = vlaneseq
        %v2172 = vshrl.u32 %v2171, 7
        %v2173 = vsub.s32 %v2170, %v2172
        %v2174 = vrot.slane %v2166, %v2173
        %2176 = vset.pattern.permute.xlu0 0
        %2177 = vperm.xlu0 %2176, %v2090
        %v2178 = vpop.permute.xlu0 %2177
        %v2181 = vunpack.c.l.s4 839922192
        %v2182 = vunpack.c.0.s8 %v2181
        %v2183 = vlaneseq
        %v2184 = vshrl.u32 %v2183, 7
        %v2185 = vsub.s32 %v2182, %v2184
        %v2186 = vrot.slane %v2178, %v2185
        %v2195 = vunpack.c.l.b16 %v2102
        %v2196 = vunpack.c.l.b16 %v2114
        %v2197 = vunpack.c.l.b16 %v2126
        %v2198 = vunpack.c.l.b16 %v2138
        %v2199 = vunpack.c.l.b16 %v2150
        %v2200 = vunpack.c.l.b16 %v2162
        %v2201 = vunpack.c.l.b16 %v2174
        %v2202 = vunpack.c.l.b16 %v2186
        %v2203 = vpack.c.b16 %v2196, %v2195
        %v2204 = vpack.c.b16 %v2198, %v2197
        %v2205 = vpack.c.b16 %v2200, %v2199
        %v2206 = vpack.c.b16 %v2202, %v2201
        %v2211 = vadd.bf16 %v2067, %v2203
        %v2212 = vadd.bf16 %v2068, %v2203
        %v2213 = vadd.bf16 %v2069, %v2203
        %v2214 = vadd.bf16 %v2070, %v2203
        %v2215 = vadd.bf16 %v2071, %v2204
        %v2216 = vadd.bf16 %v2072, %v2204
        %v2217 = vadd.bf16 %v2073, %v2204
        %v2218 = vadd.bf16 %v2074, %v2204
        %v2219 = vadd.bf16 %v2075, %v2205
        %v2220 = vadd.bf16 %v2076, %v2205
        %v2221 = vadd.bf16 %v2077, %v2205
        %v2222 = vadd.bf16 %v2078, %v2205
        %v2223 = vadd.bf16 %v2079, %v2206
        %v2224 = vadd.bf16 %v2080, %v2206
        %v2225 = vadd.bf16 %v2081, %v2206
        %v2226 = vadd.bf16 %v2082, %v2206
        %v2227 = vmax.bf16 %v2211, 0
        %v2228 = vmax.bf16 %v2212, 0
        %v2229 = vmax.bf16 %v2213, 0
        %v2230 = vmax.bf16 %v2214, 0
        %v2231 = vmax.bf16 %v2215, 0
        %v2232 = vmax.bf16 %v2216, 0
        %v2233 = vmax.bf16 %v2217, 0
        %v2234 = vmax.bf16 %v2218, 0
        %v2235 = vmax.bf16 %v2219, 0
        %v2236 = vmax.bf16 %v2220, 0
        %v2237 = vmax.bf16 %v2221, 0
        %v2238 = vmax.bf16 %v2222, 0
        %v2239 = vmax.bf16 %v2223, 0
        %v2240 = vmax.bf16 %v2224, 0
        %v2241 = vmax.bf16 %v2225, 0
        %v2242 = vmax.bf16 %v2226, 0
        %v2243 = vld [vmem:[%s5] sm:$0x3]
        %v2244 = vld [vmem:[%s6] sm:$0x7]
        %2246 = vset.pattern.permute.xlu0 0
        %2247 = vperm.xlu0 %2246, %v2244
        %v2248 = vpop.permute.xlu0 %2247
        %v2251 = vsel %vm1908, %v2243, 0
        %2253 = vmatprep.subr.bf16.mxu0 %v2228
        %2254 = vmatpush1.bf16.msra.mxu0 %v2227
        %2255 = vmatprep.subr.bf16.mxu0 %v2232
        %2256 = vmatpush1.bf16.msra.mxu0 %v2231
        %2257 = vmatprep.subr.bf16.mxu0 %v2236
        %2258 = vmatpush1.bf16.msra.mxu0 %v2235
        %2259 = vmatprep.subr.bf16.mxu0 %v2240
        %2260 = vmatpush1.bf16.msra.mxu0 %v2239
        %2261 = vmatprep.subr.bf16.mxu0 0
        %2262 = vmatpush1.bf16.msra.mxu0 0
        %2263 = vmatprep.subr.bf16.mxu0 0
        %2264 = vmatpush1.bf16.msra.mxu0 0
        %2265 = vmatprep.subr.bf16.mxu0 0
        %2266 = vmatpush1.bf16.msra.mxu0 0
        %2267 = vmatprep.subr.bf16.mxu0 0
        %2268 = vmatpush1.bf16.msra.mxu0 0
        %2269 = vmatprep.subr.bf16.mxu0 0
        %2270 = vmatpush1.bf16.msra.mxu0 0
        %2271 = vmatprep.subr.bf16.mxu0 0
        %2272 = vmatpush1.bf16.msra.mxu0 0
        %2273 = vmatprep.subr.bf16.mxu0 0
        %2274 = vmatpush1.bf16.msra.mxu0 0
        %2275 = vmatprep.subr.bf16.mxu0 0
        %2276 = vmatpush1.bf16.msra.mxu0 0
        %2277 = vmatprep.subr.bf16.mxu0 0
        %2278 = vmatpush1.bf16.msra.mxu0 0
        %2279 = vmatprep.subr.bf16.mxu0 0
        %2280 = vmatpush1.bf16.msra.mxu0 0
        %2281 = vmatprep.subr.bf16.mxu0 0
        %2282 = vmatpush1.bf16.msra.mxu0 0
        %2283 = vmatprep.subr.bf16.mxu0 0
        %2284 = vmatpush1.bf16.msra.mxu0 0
        %2285 = vmatprep.mubr.bf16.mxu0 0
        %2286 = vmatmul.mubr.bf16.gmra.mrb[0].mxu0 %v2251
        %v2287 = vpop.f32.mrb[0].mxu0
        %v2288 = vadd.f32 %v2248, %v2287
        %v2289 = vpop.f32.mrb[0].mxu0
        %v2290 = vadd.f32 %v2248, %v2289
        %v2291 = vpop.f32.mrb[0].mxu0
        %v2292 = vpop.f32.mrb[0].mxu0
        %2293 = vdwg.mxu0
        %2294 = vmatprep.subr.bf16.mxu0 %v2230
        %2295 = vmatpush1.bf16.msra.mxu0 %v2229
        %2296 = vmatprep.subr.bf16.mxu0 %v2234
        %2297 = vmatpush1.bf16.msra.mxu0 %v2233
        %2298 = vmatprep.subr.bf16.mxu0 %v2238
        %2299 = vmatpush1.bf16.msra.mxu0 %v2237
        %2300 = vmatprep.subr.bf16.mxu0 %v2242
        %2301 = vmatpush1.bf16.msra.mxu0 %v2241
        %2302 = vmatprep.subr.bf16.mxu0 0
        %2303 = vmatpush1.bf16.msra.mxu0 0
        %2304 = vmatprep.subr.bf16.mxu0 0
        %2305 = vmatpush1.bf16.msra.mxu0 0
        %2306 = vmatprep.subr.bf16.mxu0 0
        %2307 = vmatpush1.bf16.msra.mxu0 0
        %2308 = vmatprep.subr.bf16.mxu0 0
        %2309 = vmatpush1.bf16.msra.mxu0 0
        %2310 = vmatprep.subr.bf16.mxu0 0
        %2311 = vmatpush1.bf16.msra.mxu0 0
        %2312 = vmatprep.subr.bf16.mxu0 0
        %2313 = vmatpush1.bf16.msra.mxu0 0
        %2314 = vmatprep.subr.bf16.mxu0 0
        %2315 = vmatpush1.bf16.msra.mxu0 0
        %2316 = vmatprep.subr.bf16.mxu0 0
        %2317 = vmatpush1.bf16.msra.mxu0 0
        %2318 = vmatprep.subr.bf16.mxu0 0
        %2319 = vmatpush1.bf16.msra.mxu0 0
        %2320 = vmatprep.subr.bf16.mxu0 0
        %2321 = vmatpush1.bf16.msra.mxu0 0
        %2322 = vmatprep.subr.bf16.mxu0 0
        %2323 = vmatpush1.bf16.msra.mxu0 0
        %2324 = vmatprep.subr.bf16.mxu0 0
        %2325 = vmatpush1.bf16.msra.mxu0 0
        %2326 = vmatprep.mubr.bf16.mxu0 0
        %2327 = vmatmul.mubr.bf16.gmra.mrb[0].mxu0 %v2251
        %v2328 = vpop.f32.mrb[0].mxu0
        %v2329 = vadd.f32 %v2248, %v2328
        %v2330 = vpop.f32.mrb[0].mxu0
        %v2331 = vadd.f32 %v2248, %v2330
        %v2332 = vpop.f32.mrb[0].mxu0
        %v2333 = vpop.f32.mrb[0].mxu0
        %2334 = vdwg.mxu0
        %v2339 = vcombine.low %v2288, %v2290
        %v2340 = vcombine.low %v2329, %v2331
        %2343 = vst [vmem:[%s272] sm:$0x77] %v2339
        %2344 = vst [vmem:[%s272 + $0x8] sm:$0x77] %v2340
        %s2345 = sand.u32 %s181, 1
        %s2346 = scalar_lea.sflag [#allocation3], %s2345
        %s2347 = sand.u32 %s181, 1
        %s2348 = smul.addr %s2347, 16
        %s2349 = scalar_lea.vmem [#allocation2], %s2348
        // Predicated region
        $region49: #{neupix_forward.1} parent=47 // pred_check
          %p2350 = pneg %p191
        $region50: #{neupix_forward.1} parent=47 // pred_check_branch
          %2352 = sbr.rel (%p2350) target = $region52
        $region51: #{neupix_forward.1} parent=47 // pred_region
          %s2353 = smul.u32 4, %s21
          %s2355 = ssub.s32 256, 256
          %2356 = vsyncadd %s2346, %s2355
          %s2357 = smul.addr %s2353, 64
          %s2358 = scalar_lea.hbm %s7, %s2357
          %s2360 = sshll.u32 %s2349, 4
          %s2361 = int_to_ptr.vmem [resolvable:$true] %s2360
          %2363 = dma.vmem_to_hbm [thread:$0]  %s2361, 256, %s2358, %s2346
        $region52: #{neupix_forward.1} parent=47 // pred_fallthru
          _
      $region48: #{neupix_forward.1} parent=5 // pred_fallthru
        _
      %p2364 = scmp.le.s32.totalorder 2, %s16
      // Predicated region
      $region53: #{neupix_forward.1} parent=5 // pred_check
        %p2365 = pneg %p2364
      $region54: #{neupix_forward.1} parent=5 // pred_check_branch
        %2367 = sbr.rel (%p2365) target = $region56
      $region55: #{neupix_forward.1} parent=5 // pred_region
        %s2368 = ssub.s32 %s16, 2
        // Predicated region
        $region57: #{neupix_forward.1} parent=55 // pred_check
          %p2369 = pneg %p197
        $region58: #{neupix_forward.1} parent=55 // pred_check_branch
          %2371 = sbr.rel (%p2369) target = $region60
        $region59: #{neupix_forward.1} parent=55 // pred_region
          %s2372 = sand.u32 %s182, 1
          %s2373 = scalar_lea.sflag [#allocation3], %s2372
          %s2374 = sand.u32 %s182, 1
          %s2375 = smul.addr %s2374, 16
          %s2376 = scalar_lea.vmem [#allocation2], %s2375
          %2377 = dma.done %s2373, 256
        $region60: #{neupix_forward.1} parent=55 // pred_fallthru
          _
      $region56: #{neupix_forward.1} parent=5 // pred_fallthru
        _
    $region6: #{neupix_forward.1} parent=1 // loop_footer
      %s20 = sadd.s32 1, %s16
    $region7: #{neupix_forward.1} parent=1 // loop_footer_branch
      %15 = sbr.rel target = $region3
    $region8: #{neupix_forward.1} parent=1 // loop_exit
      _
    %2378 = vsyncpa [#allocation3], 1
    %s2379 = scalar_lea.sflag [#allocation3], 1
    %2380 = vsyncpa %s2379, 1

</llo_original>
